<compile_context>
chip_gen: v7x
topology: tpu7x:2x2x1
jax: 0.10.0
libtpu: 0.0.40
codegen_flags: <defaults>
</compile_context>

<pallas_src>
import functools
import math

import jax
import jax.numpy as jnp
from jax import lax
from jax.experimental import pallas as pl
from jax.experimental.pallas import tpu as pltpu

TEMPERATURE = 0.07
EPSILON = 0.25


def _eps_sup_infonce_kernel(
    emb_ref,      # (TM, D)  bf16   row tile of embeddings
    embt_ref,     # (D, TN)  bf16   column tile of embeddings (pre-transposed)
    labr_ref,     # (TM, 1)  int32  labels of the row tile (-1 => padding row)
    labc_ref,     # (1, Bp)  int32  all labels, resident in VMEM
    ncinv_ref,    # (1, Bp)  f32    1/numer_count per column (inf for singletons, 0 for pads)
    out_ref,      # (TM, 1)  f32    per-row sum of ce / numer_count
    m_scr,        # (TM, 1)  f32    online max of negative logits
    s_scr,        # (TM, 1)  f32    online sum of exp(neg logits - m)
    logits_scr,   # (TM, Bp) f32    cached logits strip for this row tile
    *, inv_temp, epsilon, block_m, block_n, num_col_blocks,
):
    i = pl.program_id(0)
    j = pl.program_id(1)
    TM, TN = block_m, block_n

    lab_r = labr_ref[...]                                   # (TM, 1)
    col0 = pl.multiple_of(j * TN, TN)
    lab_c = labc_ref[:, pl.ds(col0, TN)]                    # (1, TN)

    # ---- pass 1: logits tile (bf16 MXU, f32 acc) + online logsumexp over negatives ----
    logits = lax.dot_general(
        emb_ref[...], embt_ref[...], (((1,), (0,)), ((), ())),
        preferred_element_type=jnp.float32) * inv_temp       # (TM, TN) f32
    logits_scr[:, pl.ds(col0, TN)] = logits

    @pl.when(j == 0)
    def _init():
        m_scr[...] = jnp.full((TM, 1), -jnp.inf, dtype=jnp.float32)
        s_scr[...] = jnp.zeros((TM, 1), dtype=jnp.float32)

    # negatives: different label AND not a padding column
    neg = jnp.logical_and(lab_c != lab_r, lab_c >= 0)        # (TM, TN)
    tile_max = jnp.max(jnp.where(neg, logits, -jnp.inf), axis=1, keepdims=True)
    m_old = m_scr[...]
    m_new = jnp.maximum(m_old, tile_max)
    m_safe = jnp.where(m_new == -jnp.inf, 0.0, m_new)        # avoid inf - inf
    alpha = jnp.exp(m_old - m_safe)                          # == 0 when m_old == -inf
    p = jnp.where(neg, jnp.exp(logits - m_safe), 0.0)
    s_scr[...] = alpha * s_scr[...] + jnp.sum(p, axis=1, keepdims=True)
    m_scr[...] = m_new

    # ---- pass 2 (finalize): base_denom is known, walk the cached logits strip ----
    @pl.when(j == num_col_blocks - 1)
    def _finalize():
        base = m_scr[...] + jnp.log(s_scr[...])              # (TM,1); -inf if no negatives
        row_valid = lab_r >= 0                               # (TM,1)
        # diagonal mask hoisted out of the loop (TM == TN, aligned tiles)
        eye_tile = (lax.broadcasted_iota(jnp.int32, (TM, TN), 0)
                    == lax.broadcasted_iota(jnp.int32, (TM, TN), 1))
        exp_neg_eps = jnp.float32(math.exp(-epsilon))

        def body(c, row_acc):
            start = pl.multiple_of(c * TN, TN)
            l = logits_scr[:, pl.ds(start, TN)]              # (TM, TN) f32
            lc = labc_ref[:, pl.ds(start, TN)]               # (1, TN)
            nci = ncinv_ref[:, pl.ds(start, TN)]             # (1, TN)
            kill_diag = jnp.logical_and(eye_tile, c == i)
            pos = jnp.logical_and(jnp.logical_and(lc == lab_r, row_valid),
                                  jnp.logical_not(kill_diag))
            # ce = logaddexp(logit - eps, base) - logit = log(exp(-eps) + exp(base - logit))
            # base == -inf (no negatives) gives exactly -eps, matching the reference.
            ce = jnp.where(pos, jnp.log(exp_neg_eps + jnp.exp(base - l)), 0.0)
            # reciprocal multiply instead of per-element divide; 0 * inf -> NaN preserves
            # the 0/0 -> NaN semantics for singleton classes.
            return row_acc + jnp.sum(ce * nci, axis=1, keepdims=True)

        row_acc = lax.fori_loop(0, num_col_blocks, body,
                                jnp.zeros((TM, 1), dtype=jnp.float32))
        out_ref[...] = row_acc


def eps_sup_infonce_loss(embeds, labels, temperature=TEMPERATURE, epsilon=EPSILON,
                         block_m=128, block_n=128):
    B, D = embeds.shape
    assert block_m == block_n, "diagonal masking assumes square, aligned tiles"
    TM, TN = block_m, block_n
    Bp = pl.cdiv(B, TM) * TM
    pad = Bp - B

    labels = labels.astype(jnp.int32)
    emb = jnp.pad(embeds.astype(jnp.bfloat16), ((0, pad), (0, 0)))   # bf16 MXU operands
    lab = jnp.pad(labels, (0, pad), constant_values=-1)              # -1 marks padding
    embt = emb.T                                                     # (D, Bp) pre-transposed RHS

    # numer_count per column from labels only (count(label)-1); pass its reciprocal.
    counts = jnp.sum((labels[:, None] == labels[None, :]).astype(jnp.float32), axis=0)
    nc_inv = 1.0 / (counts - 1.0)                                    # +inf for singleton classes
    nc_inv = jnp.pad(nc_inv, (0, pad))                               # padded columns contribute 0

    kernel = functools.partial(
        _eps_sup_infonce_kernel,
        inv_temp=1.0 / temperature, epsilon=epsilon,
        block_m=TM, block_n=TN, num_col_blocks=Bp // TN)

    row_sums = pl.pallas_call(
        kernel,
        out_shape=jax.ShapeDtypeStruct((Bp, 1), jnp.float32),
        grid_spec=pltpu.PrefetchScalarGridSpec(
            num_scalar_prefetch=0,
            grid=(Bp // TM, Bp // TN),
            in_specs=[
                pl.BlockSpec((TM, D), lambda i, j: (i, 0)),   # row tile (resident across j)
                pl.BlockSpec((D, TN), lambda i, j: (0, j)),   # streamed column tiles
                pl.BlockSpec((TM, 1), lambda i, j: (i, 0)),   # row labels
                pl.BlockSpec((1, Bp), lambda i, j: (0, 0)),   # all labels, resident
                pl.BlockSpec((1, Bp), lambda i, j: (0, 0)),   # 1/numer_count, resident
            ],
            out_specs=pl.BlockSpec((TM, 1), lambda i, j: (i, 0)),
            scratch_shapes=[
                pltpu.VMEM((TM, 1), jnp.float32),             # m
                pltpu.VMEM((TM, 1), jnp.float32),             # s
                pltpu.VMEM((TM, Bp), jnp.float32),            # logits strip cache
            ]),
        compiler_params=pltpu.CompilerParams(
            dimension_semantics=("parallel", "arbitrary")),
        cost_estimate=pl.CostEstimate(
            flops=2 * Bp * Bp * D,
            transcendentals=3 * Bp * Bp,
            bytes_accessed=(Bp // TM) * Bp * D * 2 + Bp * D * 2 + Bp * 24),
    )(emb, embt, lab.reshape(Bp, 1), lab.reshape(1, Bp), nc_inv.reshape(1, Bp))

    return jnp.sum(row_sums) / jnp.float32(B)


def reference_loss(embeds, labels, temperature=TEMPERATURE, epsilon=EPSILON):
    """Pure-JAX mirror of the PyTorch forward (for correctness check)."""
    B = embeds.shape[0]
    logits = (embeds @ embeds.T) / temperature
    same = labels[None, :] == labels[:, None]
    denom_act = jnp.where(~same, logits, -jnp.inf)
    base_row = jax.nn.logsumexp(denom_act, axis=0)
    base = base_row[:, None]
    eye = jnp.eye(B, dtype=bool)
    in_numer = same & ~eye
    numer_count = in_numer.sum(axis=0)
    numer_logits = jnp.where(in_numer, logits, 0.0)
    lse2 = jnp.logaddexp(logits - epsilon, base)
    log_denom = jnp.where(in_numer, lse2, 0.0)
    ce = -(numer_logits - log_denom)
    return jnp.sum(ce / numer_count) / B


if __name__ == "__main__":
    key = jax.random.PRNGKey(0)
    B, D = 8, 32
    x = jax.random.normal(key, (B, D), dtype=jnp.float32)
    embeds = x / jnp.linalg.norm(x, axis=1, keepdims=True)        # normalized over D
    labels = jnp.array([0, 0, 1, 1, 2, 2, 3, 3], dtype=jnp.int32)  # every class has >=2 samples

    loss = eps_sup_infonce_loss(embeds, labels)
    jax.block_until_ready(loss)

    # Compare against an f32 reference evaluated on the same bf16-rounded embeddings
    # (the kernel feeds bf16 to the MXU and accumulates in f32).
    ref = reference_loss(embeds.astype(jnp.bfloat16).astype(jnp.float32), labels)
    assert jnp.allclose(loss, ref, atol=1e-3, rtol=1e-3), (loss, ref)
    print("KERNEL_OK")
</pallas_src>

<mosaic_0001>
module attributes {stable_mosaic.version = 11 : i64} {
  func.func @_eps_sup_infonce_kernel(%arg0: i32, %arg1: i32, %arg2: memref<128x32xbf16, #tpu.memory_space<vmem>>, %arg3: memref<32x128xbf16, #tpu.memory_space<vmem>>, %arg4: memref<128x1xi32, #tpu.memory_space<vmem>>, %arg5: memref<1x128xi32, #tpu.memory_space<vmem>>, %arg6: memref<1x128xf32, #tpu.memory_space<vmem>>, %arg7: memref<128x1xf32, #tpu.memory_space<vmem>>, %arg8: memref<128x1xf32, #tpu.memory_space<vmem>>, %arg9: memref<128x1xf32, #tpu.memory_space<vmem>>, %arg10: memref<128x128xf32, #tpu.memory_space<vmem>>) attributes {dimension_semantics = [#tpu.dimension_semantics<parallel>, #tpu.dimension_semantics<arbitrary>], iteration_bounds = array<i64: 1, 1>, scalar_prefetch = 0 : i64, scratch_operands = 3 : i64, tpu.core_type = #tpu.core_type<tc>, window_params = [{transform_indices = @transform_0, window_bounds = array<i64: 128, 32>}, {transform_indices = @transform_1, window_bounds = array<i64: 32, 128>}, {transform_indices = @transform_2, window_bounds = array<i64: 128, 1>}, {pipeline_mode = #tpu.pipeline_mode<synchronous>, transform_indices = @transform_3, window_bounds = array<i64: 1, 128>}, {pipeline_mode = #tpu.pipeline_mode<synchronous>, transform_indices = @transform_4, window_bounds = array<i64: 1, 128>}, {transform_indices = @transform_5, window_bounds = array<i64: 128, 1>}]} {
    %c0 = arith.constant 0 : index
    %c0_0 = arith.constant 0 : index
    %0 = vector.load %arg4[%c0, %c0_0] : memref<128x1xi32, #tpu.memory_space<vmem>>, vector<128x1xi32>
    %c128_i32 = arith.constant 128 : i32
    %1 = arith.muli %arg1, %c128_i32 : i32
    %2 = tpu.assume_multiple %1, 128 : i32
    %c0_1 = arith.constant 0 : index
    %3 = arith.index_cast %2 : i32 to index
    %4 = vector.load %arg5[%c0_1, %3] : memref<1x128xi32, #tpu.memory_space<vmem>>, vector<1x128xi32>
    %c0_2 = arith.constant 0 : index
    %c0_3 = arith.constant 0 : index
    %5 = vector.load %arg2[%c0_2, %c0_3] : memref<128x32xbf16, #tpu.memory_space<vmem>>, vector<128x32xbf16>
    %c0_4 = arith.constant 0 : index
    %c0_5 = arith.constant 0 : index
    %6 = vector.load %arg3[%c0_4, %c0_5] : memref<32x128xbf16, #tpu.memory_space<vmem>>, vector<32x128xbf16>
    %cst = arith.constant dense<0.000000e+00> : vector<128x128xf32>
    %7 = tpu.matmul %5, %6, %cst {dimension_numbers = #tpu.dot_dimension_numbers<[1], [0], [0], [1], [0, 0, 1, 1], [], []>} : vector<128x32xbf16>, vector<32x128xbf16>, vector<128x128xf32> -> vector<128x128xf32>
    %cst_6 = arith.constant 14.2857141 : f32
    %8 = vector.broadcast %cst_6 : f32 to vector<128x128xf32>
    %9 = arith.mulf %7, %8 : vector<128x128xf32>
    %c0_7 = arith.constant 0 : index
    %10 = arith.index_cast %2 : i32 to index
    %11 = vector.load %arg10[%c0_7, %10] : memref<128x128xf32, #tpu.memory_space<vmem>>, vector<128x128xf32>
    tpu.vector_store %arg10[%c0_7, %10], %9 {strides = array<i32>} : memref<128x128xf32, #tpu.memory_space<vmem>>, vector<128x128xf32>,
    %c0_i32 = arith.constant 0 : i32
    %12 = arith.cmpi eq, %arg1, %c0_i32 : i32
    %13 = arith.extui %12 : i1 to i32
    %c0_i32_8 = arith.constant 0 : i32
    %14 = arith.cmpi ne, %13, %c0_i32_8 : i32
    scf.if %14 {
      %cst_26 = arith.constant 0xFF800000 : f32
      %49 = vector.broadcast %cst_26 : f32 to vector<128x1xf32>
      %c0_27 = arith.constant 0 : index
      %c0_28 = arith.constant 0 : index
      %50 = vector.load %arg8[%c0_27, %c0_28] : memref<128x1xf32, #tpu.memory_space<vmem>>, vector<128x1xf32>
      tpu.vector_store %arg8[%c0_27, %c0_28], %49 {strides = array<i32>} : memref<128x1xf32, #tpu.memory_space<vmem>>, vector<128x1xf32>,
      %cst_29 = arith.constant 0.000000e+00 : f32
      %51 = vector.broadcast %cst_29 : f32 to vector<128x1xf32>
      %c0_30 = arith.constant 0 : index
      %c0_31 = arith.constant 0 : index
      %52 = vector.load %arg9[%c0_30, %c0_31] : memref<128x1xf32, #tpu.memory_space<vmem>>, vector<128x1xf32>
      tpu.vector_store %arg9[%c0_30, %c0_31], %51 {strides = array<i32>} : memref<128x1xf32, #tpu.memory_space<vmem>>, vector<128x1xf32>,
    } else {
    }
    %15 = vector.broadcast %4 : vector<1x128xi32> to vector<128x128xi32>
    %16 = vector.broadcast %0 : vector<128x1xi32> to vector<128x128xi32>
    %17 = arith.cmpi ne, %15, %16 : vector<128x128xi32>
    %c0_i32_9 = arith.constant 0 : i32
    %18 = vector.broadcast %c0_i32_9 : i32 to vector<1x128xi32>
    %19 = arith.cmpi sge, %4, %18 : vector<1x128xi32>
    %20 = vector.broadcast %19 : vector<1x128xi1> to vector<128x128xi1>
    %21 = arith.andi %17, %20 : vector<128x128xi1>
    %cst_10 = arith.constant 0xFF800000 : f32
    %22 = vector.broadcast %cst_10 : f32 to vector<128x128xf32>
    %23 = arith.select %21, %9, %22 : vector<128x128xi1>, vector<128x128xf32>
    %cst_11 = arith.constant dense<0xFF800000> : vector<128xf32>
    %24 = vector.multi_reduction <maximumf>, %23, %cst_11 [1] : vector<128x128xf32> to vector<128xf32>
    %25 = vector.shape_cast %24 : vector<128xf32> to vector<128x1xf32>
    %c0_12 = arith.constant 0 : index
    %c0_13 = arith.constant 0 : index
    %26 = vector.load %arg8[%c0_12, %c0_13] : memref<128x1xf32, #tpu.memory_space<vmem>>, vector<128x1xf32>
    %27 = arith.maximumf %26, %25 : vector<128x1xf32>
    %cst_14 = arith.constant 0xFF800000 : f32
    %28 = vector.broadcast %cst_14 : f32 to vector<128x1xf32>
    %29 = arith.cmpf oeq, %27, %28 : vector<128x1xf32>
    %cst_15 = arith.constant 0.000000e+00 : f32
    %30 = vector.broadcast %cst_15 : f32 to vector<128x1xf32>
    %31 = arith.select %29, %30, %27 : vector<128x1xi1>, vector<128x1xf32>
    %32 = arith.subf %26, %31 : vector<128x1xf32>
    %33 = math.exp %32 : vector<128x1xf32>
    %34 = vector.broadcast %31 : vector<128x1xf32> to vector<128x128xf32>
    %35 = arith.subf %9, %34 : vector<128x128xf32>
    %36 = math.exp %35 : vector<128x128xf32>
    %cst_16 = arith.constant 0.000000e+00 : f32
    %37 = vector.broadcast %cst_16 : f32 to vector<128x128xf32>
    %38 = arith.select %21, %36, %37 : vector<128x128xi1>, vector<128x128xf32>
    %c0_17 = arith.constant 0 : index
    %c0_18 = arith.constant 0 : index
    %39 = vector.load %arg9[%c0_17, %c0_18] : memref<128x1xf32, #tpu.memory_space<vmem>>, vector<128x1xf32>
    %40 = arith.mulf %33, %39 : vector<128x1xf32>
    %cst_19 = arith.constant dense<0.000000e+00> : vector<128xf32>
    %41 = vector.multi_reduction <add>, %38, %cst_19 [1] : vector<128x128xf32> to vector<128xf32>
    %42 = vector.shape_cast %41 : vector<128xf32> to vector<128x1xf32>
    %43 = arith.addf %40, %42 : vector<128x1xf32>
    %c0_20 = arith.constant 0 : index
    %c0_21 = arith.constant 0 : index
    %44 = vector.load %arg9[%c0_20, %c0_21] : memref<128x1xf32, #tpu.memory_space<vmem>>, vector<128x1xf32>
    tpu.vector_store %arg9[%c0_20, %c0_21], %43 {strides = array<i32>} : memref<128x1xf32, #tpu.memory_space<vmem>>, vector<128x1xf32>,
    %c0_22 = arith.constant 0 : index
    %c0_23 = arith.constant 0 : index
    %45 = vector.load %arg8[%c0_22, %c0_23] : memref<128x1xf32, #tpu.memory_space<vmem>>, vector<128x1xf32>
    tpu.vector_store %arg8[%c0_22, %c0_23], %27 {strides = array<i32>} : memref<128x1xf32, #tpu.memory_space<vmem>>, vector<128x1xf32>,
    %c0_i32_24 = arith.constant 0 : i32
    %46 = arith.cmpi eq, %arg1, %c0_i32_24 : i32
    %47 = arith.extui %46 : i1 to i32
    %c0_i32_25 = arith.constant 0 : i32
    %48 = arith.cmpi ne, %47, %c0_i32_25 : i32
    scf.if %48 {
      %c0_26 = arith.constant 0 : index
      %c0_27 = arith.constant 0 : index
      %49 = vector.load %arg8[%c0_26, %c0_27] : memref<128x1xf32, #tpu.memory_space<vmem>>, vector<128x1xf32>
      %c0_28 = arith.constant 0 : index
      %c0_29 = arith.constant 0 : index
      %50 = vector.load %arg9[%c0_28, %c0_29] : memref<128x1xf32, #tpu.memory_space<vmem>>, vector<128x1xf32>
      %51 = math.log %50 : vector<128x1xf32>
      %52 = arith.addf %49, %51 : vector<128x1xf32>
      %c0_i32_30 = arith.constant 0 : i32
      %53 = vector.broadcast %c0_i32_30 : i32 to vector<128x1xi32>
      %54 = arith.cmpi sge, %0, %53 : vector<128x1xi32>
      %55 = tpu.iota {dimensions = array<i32: 0>} : vector<128x128xi32>
      %56 = tpu.iota {dimensions = array<i32: 1>} : vector<128x128xi32>
      %57 = arith.cmpi eq, %55, %56 : vector<128x128xi32>
      %cst_31 = arith.constant 0.000000e+00 : f32
      %58 = vector.broadcast %cst_31 : f32 to vector<128x1xf32>
      %cst_32 = arith.constant 0.778800785 : f32
      %c0_i32_33 = arith.constant 0 : i32
      %c128_i32_34 = arith.constant 128 : i32
      %59 = arith.muli %c0_i32_33, %c128_i32_34 : i32
      %60 = tpu.assume_multiple %59, 128 : i32
      %c0_35 = arith.constant 0 : index
      %61 = arith.index_cast %60 : i32 to index
      %62 = vector.load %arg10[%c0_35, %61] : memref<128x128xf32, #tpu.memory_space<vmem>>, vector<128x128xf32>
      %c0_36 = arith.constant 0 : index
      %63 = arith.index_cast %60 : i32 to index
      %64 = vector.load %arg5[%c0_36, %63] : memref<1x128xi32, #tpu.memory_space<vmem>>, vector<1x128xi32>
      %c0_37 = arith.constant 0 : index
      %65 = arith.index_cast %60 : i32 to index
      %66 = vector.load %arg6[%c0_37, %65] : memref<1x128xf32, #tpu.memory_space<vmem>>, vector<1x128xf32>
      %67 = arith.cmpi eq, %c0_i32_33, %arg0 : i32
      %68 = vector.broadcast %67 : i1 to vector<128x128xi1>
      %69 = arith.andi %57, %68 : vector<128x128xi1>
      %70 = vector.broadcast %64 : vector<1x128xi32> to vector<128x128xi32>
      %71 = vector.broadcast %0 : vector<128x1xi32> to vector<128x128xi32>
      %72 = arith.cmpi eq, %70, %71 : vector<128x128xi32>
      %73 = vector.broadcast %54 : vector<128x1xi1> to vector<128x128xi1>
      %74 = arith.andi %72, %73 : vector<128x128xi1>
      %cst_38 = arith.constant dense<true> : vector<128x128xi1>
      %75 = arith.xori %69, %cst_38 : vector<128x128xi1>
      %76 = arith.andi %74, %75 : vector<128x128xi1>
      %77 = vector.broadcast %52 : vector<128x1xf32> to vector<128x128xf32>
      %78 = arith.subf %77, %62 : vector<128x128xf32>
      %79 = math.exp %78 : vector<128x128xf32>
      %80 = vector.broadcast %cst_32 : f32 to vector<128x128xf32>
      %81 = arith.addf %80, %79 : vector<128x128xf32>
      %82 = math.log %81 : vector<128x128xf32>
      %cst_39 = arith.constant 0.000000e+00 : f32
      %83 = vector.broadcast %cst_39 : f32 to vector<128x128xf32>
      %84 = arith.select %76, %82, %83 : vector<128x128xi1>, vector<128x128xf32>
      %85 = vector.broadcast %66 : vector<1x128xf32> to vector<128x128xf32>
      %86 = arith.mulf %84, %85 : vector<128x128xf32>
      %cst_40 = arith.constant dense<0.000000e+00> : vector<128xf32>
      %87 = vector.multi_reduction <add>, %86, %cst_40 [1] : vector<128x128xf32> to vector<128xf32>
      %88 = vector.shape_cast %87 : vector<128xf32> to vector<128x1xf32>
      %89 = arith.addf %58, %88 : vector<128x1xf32>
      %c1_i32 = arith.constant 1 : i32
      %c0_41 = arith.constant 0 : index
      %c0_42 = arith.constant 0 : index
      %90 = vector.load %arg7[%c0_41, %c0_42] : memref<128x1xf32, #tpu.memory_space<vmem>>, vector<128x1xf32>
      tpu.vector_store %arg7[%c0_41, %c0_42], %89 {strides = array<i32>} : memref<128x1xf32, #tpu.memory_space<vmem>>, vector<128x1xf32>,
    } else {
    }
    return
  }
  func.func @transform_0(%arg0: i32, %arg1: i32) -> (i32, i32) {
    %c0_i32 = arith.constant 0 : i32
    %c0_i32_0 = arith.constant 0 : i32
    return %arg0, %c0_i32 : i32, i32
  }
  func.func @transform_1(%arg0: i32, %arg1: i32) -> (i32, i32) {
    %c0_i32 = arith.constant 0 : i32
    %c0_i32_0 = arith.constant 0 : i32
    return %c0_i32, %arg1 : i32, i32
  }
  func.func @transform_2(%arg0: i32, %arg1: i32) -> (i32, i32) {
    %c0_i32 = arith.constant 0 : i32
    %c0_i32_0 = arith.constant 0 : i32
    return %arg0, %c0_i32 : i32, i32
  }
  func.func @transform_3(%arg0: i32, %arg1: i32) -> (i32, i32) {
    %c0_i32 = arith.constant 0 : i32
    %c0_i32_0 = arith.constant 0 : i32
    %c0_i32_1 = arith.constant 0 : i32
    return %c0_i32, %c0_i32_0 : i32, i32
  }
  func.func @transform_4(%arg0: i32, %arg1: i32) -> (i32, i32) {
    %c0_i32 = arith.constant 0 : i32
    %c0_i32_0 = arith.constant 0 : i32
    %c0_i32_1 = arith.constant 0 : i32
    return %c0_i32, %c0_i32_0 : i32, i32
  }
  func.func @transform_5(%arg0: i32, %arg1: i32) -> (i32, i32) {
    %c0_i32 = arith.constant 0 : i32
    %c0_i32_0 = arith.constant 0 : i32
    return %arg0, %c0_i32 : i32, i32
  }
}

</mosaic_0001>

<llo_original>
// kernel: tpu_custom_call.1
$region0: #{tpu_custom_call.1}
  #allocation0 [shape = 'u32[]', space=smem, size = 0x4, offset = 0x4, fixed_abs, tag = 'smem constant byte address 0x4 - core index']
  #allocation1 [shape = 'u32[144,128]{1,0:T(1,128)}', space=vmem, size = 0x12000, scoped, tag = 'internal scratch']
  #allocation2 [shape = 'f32[128,1]{1,0:T(8,128)}', space=vmem, size = 0x10000, scoped, tag = 'scratch operand']
  #allocation3 [shape = 'f32[128,1]{1,0:T(8,128)}', space=vmem, size = 0x10000, scoped, tag = 'scratch operand']
  #allocation4 [shape = 'f32[128,128]{1,0:T(8,128)}', space=vmem, size = 0x10000, scoped, tag = 'scratch operand']
  %s0 = inlined_call_operand.vmem [shape: bf16[128,32], index: 0, kind: input, shape index: {}]
  %s1 = inlined_call_operand.vmem [shape: bf16[32,128], index: 1, kind: input, shape index: {}]
  %s2 = inlined_call_operand.vmem [shape: s32[128,1], index: 2, kind: input, shape index: {}]
  %s3 = inlined_call_operand.vmem [shape: s32[1,128], index: 3, kind: input, shape index: {}]
  %s4 = inlined_call_operand.vmem [shape: f32[1,128], index: 4, kind: input, shape index: {}]
  %s5 = inlined_call_operand.vmem [shape: f32[128,1], index: 5, kind: output, shape index: {}]
  %s6 = sld [smem:[#allocation0]]
  $region38: #{tpu_custom_call.1} parent=0
    _
  %s8 = ssub.s32 1, %s6
  %s9 = scalar_select 0, %s8, %s6
  // Predicated region
  $region2: #{tpu_custom_call.1} parent=0 // pred_check
    _
  $region3: #{tpu_custom_call.1} parent=0 // pred_check_branch
    %11 = sbr.rel (0) target = $region5
  $region4: #{tpu_custom_call.1} parent=0 // pred_region
    _
  $region5: #{tpu_custom_call.1} parent=0 // pred_fallthru
    _
  // Predicated region
  $region6: #{tpu_custom_call.1} parent=0 // pred_check
    _
  $region7: #{tpu_custom_call.1} parent=0 // pred_check_branch
    %13 = sbr.rel (0) target = $region9
  $region8: #{tpu_custom_call.1} parent=0 // pred_region
    _
  $region9: #{tpu_custom_call.1} parent=0 // pred_fallthru
    _
  // Predicated region
  $region10: #{tpu_custom_call.1} parent=0 // pred_check
    _
  $region11: #{tpu_custom_call.1} parent=0 // pred_check_branch
    %15 = sbr.rel (0) target = $region13
  $region12: #{tpu_custom_call.1} parent=0 // pred_region
    _
  $region13: #{tpu_custom_call.1} parent=0 // pred_fallthru
    _
  // Predicated region
  $region14: #{tpu_custom_call.1} parent=0 // pred_check
    _
  $region15: #{tpu_custom_call.1} parent=0 // pred_check_branch
    %17 = sbr.rel (0) target = $region17
  $region16: #{tpu_custom_call.1} parent=0 // pred_region
    _
  $region17: #{tpu_custom_call.1} parent=0 // pred_fallthru
    _
  // Predicated region
  $region18: #{tpu_custom_call.1} parent=0 // pred_check
    _
  $region19: #{tpu_custom_call.1} parent=0 // pred_check_branch
    %19 = sbr.rel (0) target = $region21
  $region20: #{tpu_custom_call.1} parent=0 // pred_region
    _
  $region21: #{tpu_custom_call.1} parent=0 // pred_fallthru
    _
  %v21 = vld [vmem:[%s2] sm:$0xff]
  %v22 = vld [vmem:[%s2 + $0x8] sm:$0xff]
  %v23 = vld [vmem:[%s2 + $0x10] sm:$0xff]
  %v24 = vld [vmem:[%s2 + $0x18] sm:$0xff]
  %v25 = vld [vmem:[%s2 + $0x20] sm:$0xff]
  %v26 = vld [vmem:[%s2 + $0x28] sm:$0xff]
  %v27 = vld [vmem:[%s2 + $0x30] sm:$0xff]
  %v28 = vld [vmem:[%s2 + $0x38] sm:$0xff]
  %v29 = vld [vmem:[%s2 + $0x40] sm:$0xff]
  %v30 = vld [vmem:[%s2 + $0x48] sm:$0xff]
  %v31 = vld [vmem:[%s2 + $0x50] sm:$0xff]
  %v32 = vld [vmem:[%s2 + $0x58] sm:$0xff]
  %v33 = vld [vmem:[%s2 + $0x60] sm:$0xff]
  %v34 = vld [vmem:[%s2 + $0x68] sm:$0xff]
  %v35 = vld [vmem:[%s2 + $0x70] sm:$0xff]
  %v36 = vld [vmem:[%s2 + $0x78] sm:$0xff]
  %s37 = smul.u32 0, 128
  %s38 = sshra.s32 %s37, 7
  %s39 = sand.u32 %s37, 127
  %s40 = scalar_lea.vmem %s3, %s38
  %v41 = vld [vmem:[%s40] sm:$0x1]
  %v42 = vld [vmem:[%s0] sm:$0xf]
  %v43 = vld [vmem:[%s0 + $0x4] sm:$0xf]
  %v44 = vld [vmem:[%s0 + $0x8] sm:$0xf]
  %v45 = vld [vmem:[%s0 + $0xc] sm:$0xf]
  %v46 = vld [vmem:[%s0 + $0x10] sm:$0xf]
  %v47 = vld [vmem:[%s0 + $0x14] sm:$0xf]
  %v48 = vld [vmem:[%s0 + $0x18] sm:$0xf]
  %v49 = vld [vmem:[%s0 + $0x1c] sm:$0xf]
  %v50 = vld [vmem:[%s0 + $0x20] sm:$0xf]
  %v51 = vld [vmem:[%s0 + $0x24] sm:$0xf]
  %v52 = vld [vmem:[%s0 + $0x28] sm:$0xf]
  %v53 = vld [vmem:[%s0 + $0x2c] sm:$0xf]
  %v54 = vld [vmem:[%s0 + $0x30] sm:$0xf]
  %v55 = vld [vmem:[%s0 + $0x34] sm:$0xf]
  %v56 = vld [vmem:[%s0 + $0x38] sm:$0xf]
  %v57 = vld [vmem:[%s0 + $0x3c] sm:$0xf]
  %v58 = vld [vmem:[%s1] sm:$0xf]
  %v59 = vld [vmem:[%s1 + $0x4] sm:$0xf]
  %v60 = vld [vmem:[%s1 + $0x8] sm:$0xf]
  %v61 = vld [vmem:[%s1 + $0xc] sm:$0xf]
  %v78 = vunpack.c.l.b16 %v42
  %v79 = vunpack.c.l.b16 %v43
  %v80 = vunpack.c.l.b16 %v44
  %v81 = vunpack.c.l.b16 %v45
  %v82 = vunpack.c.l.b16 %v46
  %v83 = vunpack.c.l.b16 %v47
  %v84 = vunpack.c.l.b16 %v48
  %v85 = vunpack.c.l.b16 %v49
  %v86 = vunpack.c.l.b16 %v50
  %v87 = vunpack.c.l.b16 %v51
  %v88 = vunpack.c.l.b16 %v52
  %v89 = vunpack.c.l.b16 %v53
  %v90 = vunpack.c.l.b16 %v54
  %v91 = vunpack.c.l.b16 %v55
  %v92 = vunpack.c.l.b16 %v56
  %v93 = vunpack.c.l.b16 %v57
  %v94 = vpack.c.b16 %v79, %v78
  %v95 = vpack.c.b16 %v81, %v80
  %v96 = vpack.c.b16 %v83, %v82
  %v97 = vpack.c.b16 %v85, %v84
  %v98 = vpack.c.b16 %v87, %v86
  %v99 = vpack.c.b16 %v89, %v88
  %v100 = vpack.c.b16 %v91, %v90
  %v101 = vpack.c.b16 %v93, %v92
  %v106 = vunpack.c.l.b16 %v58
  %v107 = vunpack.c.l.b16 %v59
  %v108 = vunpack.c.l.b16 %v60
  %v109 = vunpack.c.l.b16 %v61
  %v110 = vpack.c.b16 %v107, %v106
  %v111 = vpack.c.b16 %v109, %v108
  %vm114 = vcmask 261120
  %v116 = vsel %vm114, %v94, 0
  %v119 = vsel %vm114, %v95, 0
  %v122 = vsel %vm114, %v96, 0
  %v125 = vsel %vm114, %v97, 0
  %v128 = vsel %vm114, %v98, 0
  %v131 = vsel %vm114, %v99, 0
  %v134 = vsel %vm114, %v100, 0
  %v137 = vsel %vm114, %v101, 0
  %139 = vmatprep.subr.bf16.mxu0 0
  %140 = vmatpush1.bf16.msra.mxu0 %v110
  %141 = vmatprep.subr.bf16.mxu0 0
  %142 = vmatpush1.bf16.msra.mxu0 %v111
  %143 = vmatprep.subr.bf16.mxu0 0
  %144 = vmatpush1.bf16.msra.mxu0 0
  %145 = vmatprep.subr.bf16.mxu0 0
  %146 = vmatpush1.bf16.msra.mxu0 0
  %147 = vmatprep.subr.bf16.mxu0 0
  %148 = vmatpush1.bf16.msra.mxu0 0
  %149 = vmatprep.subr.bf16.mxu0 0
  %150 = vmatpush1.bf16.msra.mxu0 0
  %151 = vmatprep.subr.bf16.mxu0 0
  %152 = vmatpush1.bf16.msra.mxu0 0
  %153 = vmatprep.subr.bf16.mxu0 0
  %154 = vmatpush1.bf16.msra.mxu0 0
  %155 = vmatprep.subr.bf16.mxu0 0
  %156 = vmatpush1.bf16.msra.mxu0 0
  %157 = vmatprep.subr.bf16.mxu0 0
  %158 = vmatpush1.bf16.msra.mxu0 0
  %159 = vmatprep.subr.bf16.mxu0 0
  %160 = vmatpush1.bf16.msra.mxu0 0
  %161 = vmatprep.subr.bf16.mxu0 0
  %162 = vmatpush1.bf16.msra.mxu0 0
  %163 = vmatprep.subr.bf16.mxu0 0
  %164 = vmatpush1.bf16.msra.mxu0 0
  %165 = vmatprep.subr.bf16.mxu0 0
  %166 = vmatpush1.bf16.msra.mxu0 0
  %167 = vmatprep.subr.bf16.mxu0 0
  %168 = vmatpush1.bf16.msra.mxu0 0
  %169 = vmatprep.subr.bf16.mxu0 0
  %170 = vmatpush1.bf16.msra.mxu0 0
  %171 = vmatprep.mubr.bf16.mxu0 0
  %172 = vmatmul.mubr.bf16.gmra.mrb[0].mxu0 %v116
  %v173 = vpop.f32.mrb[0].mxu0
  %v174 = vadd.f32 0.0, %v173
  %v175 = vpop.f32.mrb[0].mxu0
  %v176 = vpop.f32.mrb[0].mxu0
  %v177 = vadd.f32 0.0, %v176
  %v178 = vpop.f32.mrb[0].mxu0
  %179 = vmatprep.mubr.bf16.mxu0 0
  %180 = vmatmul.mubr.bf16.gmra.mrb[0].mxu0 %v119
  %v181 = vpop.f32.mrb[0].mxu0
  %v182 = vadd.f32 0.0, %v181
  %v183 = vpop.f32.mrb[0].mxu0
  %v184 = vpop.f32.mrb[0].mxu0
  %v185 = vadd.f32 0.0, %v184
  %v186 = vpop.f32.mrb[0].mxu0
  %187 = vmatprep.mubr.bf16.mxu0 0
  %188 = vmatmul.mubr.bf16.gmra.mrb[0].mxu0 %v122
  %v189 = vpop.f32.mrb[0].mxu0
  %v190 = vadd.f32 0.0, %v189
  %v191 = vpop.f32.mrb[0].mxu0
  %v192 = vpop.f32.mrb[0].mxu0
  %v193 = vadd.f32 0.0, %v192
  %v194 = vpop.f32.mrb[0].mxu0
  %195 = vmatprep.mubr.bf16.mxu0 0
  %196 = vmatmul.mubr.bf16.gmra.mrb[0].mxu0 %v125
  %v197 = vpop.f32.mrb[0].mxu0
  %v198 = vadd.f32 0.0, %v197
  %v199 = vpop.f32.mrb[0].mxu0
  %v200 = vpop.f32.mrb[0].mxu0
  %v201 = vadd.f32 0.0, %v200
  %v202 = vpop.f32.mrb[0].mxu0
  %203 = vmatprep.mubr.bf16.mxu0 0
  %204 = vmatmul.mubr.bf16.gmra.mrb[0].mxu0 %v128
  %v205 = vpop.f32.mrb[0].mxu0
  %v206 = vadd.f32 0.0, %v205
  %v207 = vpop.f32.mrb[0].mxu0
  %v208 = vpop.f32.mrb[0].mxu0
  %v209 = vadd.f32 0.0, %v208
  %v210 = vpop.f32.mrb[0].mxu0
  %211 = vmatprep.mubr.bf16.mxu0 0
  %212 = vmatmul.mubr.bf16.gmra.mrb[0].mxu0 %v131
  %v213 = vpop.f32.mrb[0].mxu0
  %v214 = vadd.f32 0.0, %v213
  %v215 = vpop.f32.mrb[0].mxu0
  %v216 = vpop.f32.mrb[0].mxu0
  %v217 = vadd.f32 0.0, %v216
  %v218 = vpop.f32.mrb[0].mxu0
  %219 = vmatprep.mubr.bf16.mxu0 0
  %220 = vmatmul.mubr.bf16.gmra.mrb[0].mxu0 %v134
  %v221 = vpop.f32.mrb[0].mxu0
  %v222 = vadd.f32 0.0, %v221
  %v223 = vpop.f32.mrb[0].mxu0
  %v224 = vpop.f32.mrb[0].mxu0
  %v225 = vadd.f32 0.0, %v224
  %v226 = vpop.f32.mrb[0].mxu0
  %227 = vmatprep.mubr.bf16.mxu0 0
  %228 = vmatmul.mubr.bf16.gmra.mrb[0].mxu0 %v137
  %v229 = vpop.f32.mrb[0].mxu0
  %v230 = vadd.f32 0.0, %v229
  %v231 = vpop.f32.mrb[0].mxu0
  %v232 = vpop.f32.mrb[0].mxu0
  %v233 = vadd.f32 0.0, %v232
  %v234 = vpop.f32.mrb[0].mxu0
  %235 = vdwg.mxu0
  %v236 = vmul.f32 %v174, 14.285714
  %v237 = vmul.f32 %v177, 14.285714
  %v238 = vmul.f32 %v182, 14.285714
  %v239 = vmul.f32 %v185, 14.285714
  %v240 = vmul.f32 %v190, 14.285714
  %v241 = vmul.f32 %v193, 14.285714
  %v242 = vmul.f32 %v198, 14.285714
  %v243 = vmul.f32 %v201, 14.285714
  %v244 = vmul.f32 %v206, 14.285714
  %v245 = vmul.f32 %v209, 14.285714
  %v246 = vmul.f32 %v214, 14.285714
  %v247 = vmul.f32 %v217, 14.285714
  %v248 = vmul.f32 %v222, 14.285714
  %v249 = vmul.f32 %v225, 14.285714
  %v250 = vmul.f32 %v230, 14.285714
  %v251 = vmul.f32 %v233, 14.285714
  %s252 = scalar_lea.vmem [#allocation4], %s38
  %253 = vst [vmem:[%s252] sm:$0xff] %v236
  %254 = vst [vmem:[%s252 + $0x8] sm:$0xff] %v237
  %255 = vst [vmem:[%s252 + $0x10] sm:$0xff] %v238
  %256 = vst [vmem:[%s252 + $0x18] sm:$0xff] %v239
  %257 = vst [vmem:[%s252 + $0x20] sm:$0xff] %v240
  %258 = vst [vmem:[%s252 + $0x28] sm:$0xff] %v241
  %259 = vst [vmem:[%s252 + $0x30] sm:$0xff] %v242
  %260 = vst [vmem:[%s252 + $0x38] sm:$0xff] %v243
  %261 = vst [vmem:[%s252 + $0x40] sm:$0xff] %v244
  %262 = vst [vmem:[%s252 + $0x48] sm:$0xff] %v245
  %263 = vst [vmem:[%s252 + $0x50] sm:$0xff] %v246
  %264 = vst [vmem:[%s252 + $0x58] sm:$0xff] %v247
  %265 = vst [vmem:[%s252 + $0x60] sm:$0xff] %v248
  %266 = vst [vmem:[%s252 + $0x68] sm:$0xff] %v249
  %267 = vst [vmem:[%s252 + $0x70] sm:$0xff] %v250
  %268 = vst [vmem:[%s252 + $0x78] sm:$0xff] %v251
  %p269 = scmp.eq.s32.totalorder 0, 0
  // Predicated region
  $region22: #{tpu_custom_call.1} parent=0 // pred_check
    %p270 = pneg %p269
  $region23: #{tpu_custom_call.1} parent=0 // pred_check_branch
    %272 = sbr.rel (%p270) target = $region25
  $region24: #{tpu_custom_call.1} parent=0 // pred_region
    %vm273 = vcmask 7168
    %274 = vst.msk [vmem:[#allocation2] sm:$0xff] %vm273, -inf
    %275 = vst.msk [vmem:[#allocation2 + $0x8] sm:$0xff] %vm273, -inf
    %276 = vst.msk [vmem:[#allocation2 + $0x10] sm:$0xff] %vm273, -inf
    %277 = vst.msk [vmem:[#allocation2 + $0x18] sm:$0xff] %vm273, -inf
    %278 = vst.msk [vmem:[#allocation2 + $0x20] sm:$0xff] %vm273, -inf
    %279 = vst.msk [vmem:[#allocation2 + $0x28] sm:$0xff] %vm273, -inf
    %280 = vst.msk [vmem:[#allocation2 + $0x30] sm:$0xff] %vm273, -inf
    %281 = vst.msk [vmem:[#allocation2 + $0x38] sm:$0xff] %vm273, -inf
    %282 = vst.msk [vmem:[#allocation2 + $0x40] sm:$0xff] %vm273, -inf
    %283 = vst.msk [vmem:[#allocation2 + $0x48] sm:$0xff] %vm273, -inf
    %284 = vst.msk [vmem:[#allocation2 + $0x50] sm:$0xff] %vm273, -inf
    %285 = vst.msk [vmem:[#allocation2 + $0x58] sm:$0xff] %vm273, -inf
    %286 = vst.msk [vmem:[#allocation2 + $0x60] sm:$0xff] %vm273, -inf
    %287 = vst.msk [vmem:[#allocation2 + $0x68] sm:$0xff] %vm273, -inf
    %288 = vst.msk [vmem:[#allocation2 + $0x70] sm:$0xff] %vm273, -inf
    %289 = vst.msk [vmem:[#allocation2 + $0x78] sm:$0xff] %vm273, -inf
    %290 = vst.msk [vmem:[#allocation3] sm:$0xff] %vm273, 0.0
    %291 = vst.msk [vmem:[#allocation3 + $0x8] sm:$0xff] %vm273, 0.0
    %292 = vst.msk [vmem:[#allocation3 + $0x10] sm:$0xff] %vm273, 0.0
    %293 = vst.msk [vmem:[#allocation3 + $0x18] sm:$0xff] %vm273, 0.0
    %294 = vst.msk [vmem:[#allocation3 + $0x20] sm:$0xff] %vm273, 0.0
    %295 = vst.msk [vmem:[#allocation3 + $0x28] sm:$0xff] %vm273, 0.0
    %296 = vst.msk [vmem:[#allocation3 + $0x30] sm:$0xff] %vm273, 0.0
    %297 = vst.msk [vmem:[#allocation3 + $0x38] sm:$0xff] %vm273, 0.0
    %298 = vst.msk [vmem:[#allocation3 + $0x40] sm:$0xff] %vm273, 0.0
    %299 = vst.msk [vmem:[#allocation3 + $0x48] sm:$0xff] %vm273, 0.0
    %300 = vst.msk [vmem:[#allocation3 + $0x50] sm:$0xff] %vm273, 0.0
    %301 = vst.msk [vmem:[#allocation3 + $0x58] sm:$0xff] %vm273, 0.0
    %302 = vst.msk [vmem:[#allocation3 + $0x60] sm:$0xff] %vm273, 0.0
    %303 = vst.msk [vmem:[#allocation3 + $0x68] sm:$0xff] %vm273, 0.0
    %304 = vst.msk [vmem:[#allocation3 + $0x70] sm:$0xff] %vm273, 0.0
    %305 = vst.msk [vmem:[#allocation3 + $0x78] sm:$0xff] %vm273, 0.0
  $region25: #{tpu_custom_call.1} parent=0 // pred_fallthru
    _
  %v306 = vlaneseq
  %v307 = vshrl.u32 %v306, 7
  %v308 = vsub.s32 0, %v307
  %v309 = vrot.slane %v41, %v308
  %310 = vset.pattern.permute.xlu0 0
  %311 = vperm.xlu0 %310, %v21
  %v312 = vpop.permute.xlu0 %311
  %313 = vset.pattern.permute.xlu0 0
  %314 = vperm.xlu0 %313, %v22
  %v315 = vpop.permute.xlu0 %314
  %316 = vset.pattern.permute.xlu0 0
  %317 = vperm.xlu0 %316, %v23
  %v318 = vpop.permute.xlu0 %317
  %319 = vset.pattern.permute.xlu0 0
  %320 = vperm.xlu0 %319, %v24
  %v321 = vpop.permute.xlu0 %320
  %322 = vset.pattern.permute.xlu0 0
  %323 = vperm.xlu0 %322, %v25
  %v324 = vpop.permute.xlu0 %323
  %325 = vset.pattern.permute.xlu0 0
  %326 = vperm.xlu0 %325, %v26
  %v327 = vpop.permute.xlu0 %326
  %328 = vset.pattern.permute.xlu0 0
  %329 = vperm.xlu0 %328, %v27
  %v330 = vpop.permute.xlu0 %329
  %331 = vset.pattern.permute.xlu0 0
  %332 = vperm.xlu0 %331, %v28
  %v333 = vpop.permute.xlu0 %332
  %334 = vset.pattern.permute.xlu0 0
  %335 = vperm.xlu0 %334, %v29
  %v336 = vpop.permute.xlu0 %335
  %337 = vset.pattern.permute.xlu0 0
  %338 = vperm.xlu0 %337, %v30
  %v339 = vpop.permute.xlu0 %338
  %340 = vset.pattern.permute.xlu0 0
  %341 = vperm.xlu0 %340, %v31
  %v342 = vpop.permute.xlu0 %341
  %343 = vset.pattern.permute.xlu0 0
  %344 = vperm.xlu0 %343, %v32
  %v345 = vpop.permute.xlu0 %344
  %346 = vset.pattern.permute.xlu0 0
  %347 = vperm.xlu0 %346, %v33
  %v348 = vpop.permute.xlu0 %347
  %349 = vset.pattern.permute.xlu0 0
  %350 = vperm.xlu0 %349, %v34
  %v351 = vpop.permute.xlu0 %350
  %352 = vset.pattern.permute.xlu0 0
  %353 = vperm.xlu0 %352, %v35
  %v354 = vpop.permute.xlu0 %353
  %355 = vset.pattern.permute.xlu0 0
  %356 = vperm.xlu0 %355, %v36
  %v357 = vpop.permute.xlu0 %356
  %vm358 = vcmp.ne.s32.totalorder %v309, %v312
  %vm359 = vcmp.ne.s32.totalorder %v309, %v315
  %vm360 = vcmp.ne.s32.totalorder %v309, %v318
  %vm361 = vcmp.ne.s32.totalorder %v309, %v321
  %vm362 = vcmp.ne.s32.totalorder %v309, %v324
  %vm363 = vcmp.ne.s32.totalorder %v309, %v327
  %vm364 = vcmp.ne.s32.totalorder %v309, %v330
  %vm365 = vcmp.ne.s32.totalorder %v309, %v333
  %vm366 = vcmp.ne.s32.totalorder %v309, %v336
  %vm367 = vcmp.ne.s32.totalorder %v309, %v339
  %vm368 = vcmp.ne.s32.totalorder %v309, %v342
  %vm369 = vcmp.ne.s32.totalorder %v309, %v345
  %vm370 = vcmp.ne.s32.totalorder %v309, %v348
  %vm371 = vcmp.ne.s32.totalorder %v309, %v351
  %vm372 = vcmp.ne.s32.totalorder %v309, %v354
  %vm373 = vcmp.ne.s32.totalorder %v309, %v357
  %vm374 = vcmp.ge.s32.totalorder %v41, 0
  %v375 = vsel %vm374, 1, 0
  %v376 = vlaneseq
  %v377 = vshrl.u32 %v376, 7
  %v378 = vsub.s32 0, %v377
  %v379 = vrot.slane %v375, %v378
  %vm380 = vcmp.eq.s32.totalorder %v379, 1
  %vm381 = vmand %vm358, %vm380
  %vm382 = vmand %vm359, %vm380
  %vm383 = vmand %vm360, %vm380
  %vm384 = vmand %vm361, %vm380
  %vm385 = vmand %vm362, %vm380
  %vm386 = vmand %vm363, %vm380
  %vm387 = vmand %vm364, %vm380
  %vm388 = vmand %vm365, %vm380
  %vm389 = vmand %vm366, %vm380
  %vm390 = vmand %vm367, %vm380
  %vm391 = vmand %vm368, %vm380
  %vm392 = vmand %vm369, %vm380
  %vm393 = vmand %vm370, %vm380
  %vm394 = vmand %vm371, %vm380
  %vm395 = vmand %vm372, %vm380
  %vm396 = vmand %vm373, %vm380
  %v397 = vsel %vm381, %v236, -inf
  %v398 = vsel %vm382, %v237, -inf
  %v399 = vsel %vm383, %v238, -inf
  %v400 = vsel %vm384, %v239, -inf
  %v401 = vsel %vm385, %v240, -inf
  %v402 = vsel %vm386, %v241, -inf
  %v403 = vsel %vm387, %v242, -inf
  %v404 = vsel %vm388, %v243, -inf
  %v405 = vsel %vm389, %v244, -inf
  %v406 = vsel %vm390, %v245, -inf
  %v407 = vsel %vm391, %v246, -inf
  %v408 = vsel %vm392, %v247, -inf
  %v409 = vsel %vm393, %v248, -inf
  %v410 = vsel %vm394, %v249, -inf
  %v411 = vsel %vm395, %v250, -inf
  %v412 = vsel %vm396, %v251, -inf
  %413 = vmax.xlane.f32.xlu0 %v397
  %v414 = vpop.xlane.xlu0 %413
  %415 = vmax.xlane.f32.xlu0 %v398
  %v416 = vpop.xlane.xlu0 %415
  %417 = vmax.xlane.f32.xlu0 %v399
  %v418 = vpop.xlane.xlu0 %417
  %419 = vmax.xlane.f32.xlu0 %v400
  %v420 = vpop.xlane.xlu0 %419
  %421 = vmax.xlane.f32.xlu0 %v401
  %v422 = vpop.xlane.xlu0 %421
  %423 = vmax.xlane.f32.xlu0 %v402
  %v424 = vpop.xlane.xlu0 %423
  %425 = vmax.xlane.f32.xlu0 %v403
  %v426 = vpop.xlane.xlu0 %425
  %427 = vmax.xlane.f32.xlu0 %v404
  %v428 = vpop.xlane.xlu0 %427
  %429 = vmax.xlane.f32.xlu0 %v405
  %v430 = vpop.xlane.xlu0 %429
  %431 = vmax.xlane.f32.xlu0 %v406
  %v432 = vpop.xlane.xlu0 %431
  %433 = vmax.xlane.f32.xlu0 %v407
  %v434 = vpop.xlane.xlu0 %433
  %435 = vmax.xlane.f32.xlu0 %v408
  %v436 = vpop.xlane.xlu0 %435
  %437 = vmax.xlane.f32.xlu0 %v409
  %v438 = vpop.xlane.xlu0 %437
  %439 = vmax.xlane.f32.xlu0 %v410
  %v440 = vpop.xlane.xlu0 %439
  %441 = vmax.xlane.f32.xlu0 %v411
  %v442 = vpop.xlane.xlu0 %441
  %443 = vmax.xlane.f32.xlu0 %v412
  %v444 = vpop.xlane.xlu0 %443
  %v445 = vld [vmem:[#allocation2] sm:$0xff]
  %v446 = vld [vmem:[#allocation2 + $0x8] sm:$0xff]
  %v447 = vld [vmem:[#allocation2 + $0x10] sm:$0xff]
  %v448 = vld [vmem:[#allocation2 + $0x18] sm:$0xff]
  %v449 = vld [vmem:[#allocation2 + $0x20] sm:$0xff]
  %v450 = vld [vmem:[#allocation2 + $0x28] sm:$0xff]
  %v451 = vld [vmem:[#allocation2 + $0x30] sm:$0xff]
  %v452 = vld [vmem:[#allocation2 + $0x38] sm:$0xff]
  %v453 = vld [vmem:[#allocation2 + $0x40] sm:$0xff]
  %v454 = vld [vmem:[#allocation2 + $0x48] sm:$0xff]
  %v455 = vld [vmem:[#allocation2 + $0x50] sm:$0xff]
  %v456 = vld [vmem:[#allocation2 + $0x58] sm:$0xff]
  %v457 = vld [vmem:[#allocation2 + $0x60] sm:$0xff]
  %v458 = vld [vmem:[#allocation2 + $0x68] sm:$0xff]
  %v459 = vld [vmem:[#allocation2 + $0x70] sm:$0xff]
  %v460 = vld [vmem:[#allocation2 + $0x78] sm:$0xff]
  %v461 = vmax.f32 %v445, %v414
  %v462 = vmax.f32 %v446, %v416
  %v463 = vmax.f32 %v447, %v418
  %v464 = vmax.f32 %v448, %v420
  %v465 = vmax.f32 %v449, %v422
  %v466 = vmax.f32 %v450, %v424
  %v467 = vmax.f32 %v451, %v426
  %v468 = vmax.f32 %v452, %v428
  %v469 = vmax.f32 %v453, %v430
  %v470 = vmax.f32 %v454, %v432
  %v471 = vmax.f32 %v455, %v434
  %v472 = vmax.f32 %v456, %v436
  %v473 = vmax.f32 %v457, %v438
  %v474 = vmax.f32 %v458, %v440
  %v475 = vmax.f32 %v459, %v442
  %v476 = vmax.f32 %v460, %v444
  %vm477 = vcmp.eq.f32.partialorder %v461, -inf
  %vm478 = vcmp.eq.f32.partialorder %v462, -inf
  %vm479 = vcmp.eq.f32.partialorder %v463, -inf
  %vm480 = vcmp.eq.f32.partialorder %v464, -inf
  %vm481 = vcmp.eq.f32.partialorder %v465, -inf
  %vm482 = vcmp.eq.f32.partialorder %v466, -inf
  %vm483 = vcmp.eq.f32.partialorder %v467, -inf
  %vm484 = vcmp.eq.f32.partialorder %v468, -inf
  %vm485 = vcmp.eq.f32.partialorder %v469, -inf
  %vm486 = vcmp.eq.f32.partialorder %v470, -inf
  %vm487 = vcmp.eq.f32.partialorder %v471, -inf
  %vm488 = vcmp.eq.f32.partialorder %v472, -inf
  %vm489 = vcmp.eq.f32.partialorder %v473, -inf
  %vm490 = vcmp.eq.f32.partialorder %v474, -inf
  %vm491 = vcmp.eq.f32.partialorder %v475, -inf
  %vm492 = vcmp.eq.f32.partialorder %v476, -inf
  %v493 = vsel %vm477, 0.0, %v461
  %v494 = vsel %vm478, 0.0, %v462
  %v495 = vsel %vm479, 0.0, %v463
  %v496 = vsel %vm480, 0.0, %v464
  %v497 = vsel %vm481, 0.0, %v465
  %v498 = vsel %vm482, 0.0, %v466
  %v499 = vsel %vm483, 0.0, %v467
  %v500 = vsel %vm484, 0.0, %v468
  %v501 = vsel %vm485, 0.0, %v469
  %v502 = vsel %vm486, 0.0, %v470
  %v503 = vsel %vm487, 0.0, %v471
  %v504 = vsel %vm488, 0.0, %v472
  %v505 = vsel %vm489, 0.0, %v473
  %v506 = vsel %vm490, 0.0, %v474
  %v507 = vsel %vm491, 0.0, %v475
  %v508 = vsel %vm492, 0.0, %v476
  %v509 = vsub.f32 %v445, %v493
  %v510 = vsub.f32 %v446, %v494
  %v511 = vsub.f32 %v447, %v495
  %v512 = vsub.f32 %v448, %v496
  %v513 = vsub.f32 %v449, %v497
  %v514 = vsub.f32 %v450, %v498
  %v515 = vsub.f32 %v451, %v499
  %v516 = vsub.f32 %v452, %v500
  %v517 = vsub.f32 %v453, %v501
  %v518 = vsub.f32 %v454, %v502
  %v519 = vsub.f32 %v455, %v503
  %v520 = vsub.f32 %v456, %v504
  %v521 = vsub.f32 %v457, %v505
  %v522 = vsub.f32 %v458, %v506
  %v523 = vsub.f32 %v459, %v507
  %v524 = vsub.f32 %v460, %v508
  %v525 = vmul.f32 %v509, 1.442695
  %v526 = vpow.pop %v525
  %v527 = vmul.f32 %v510, 1.442695
  %v528 = vpow.pop %v527
  %v529 = vmul.f32 %v511, 1.442695
  %v530 = vpow.pop %v529
  %v531 = vmul.f32 %v512, 1.442695
  %v532 = vpow.pop %v531
  %v533 = vmul.f32 %v513, 1.442695
  %v534 = vpow.pop %v533
  %v535 = vmul.f32 %v514, 1.442695
  %v536 = vpow.pop %v535
  %v537 = vmul.f32 %v515, 1.442695
  %v538 = vpow.pop %v537
  %v539 = vmul.f32 %v516, 1.442695
  %v540 = vpow.pop %v539
  %v541 = vmul.f32 %v517, 1.442695
  %v542 = vpow.pop %v541
  %v543 = vmul.f32 %v518, 1.442695
  %v544 = vpow.pop %v543
  %v545 = vmul.f32 %v519, 1.442695
  %v546 = vpow.pop %v545
  %v547 = vmul.f32 %v520, 1.442695
  %v548 = vpow.pop %v547
  %v549 = vmul.f32 %v521, 1.442695
  %v550 = vpow.pop %v549
  %v551 = vmul.f32 %v522, 1.442695
  %v552 = vpow.pop %v551
  %v553 = vmul.f32 %v523, 1.442695
  %v554 = vpow.pop %v553
  %v555 = vmul.f32 %v524, 1.442695
  %v556 = vpow.pop %v555
  %558 = vset.pattern.permute.xlu0 0
  %559 = vperm.xlu0 %558, %v493
  %v560 = vpop.permute.xlu0 %559
  %563 = vset.pattern.permute.xlu0 0
  %564 = vperm.xlu0 %563, %v494
  %v565 = vpop.permute.xlu0 %564
  %568 = vset.pattern.permute.xlu0 0
  %569 = vperm.xlu0 %568, %v495
  %v570 = vpop.permute.xlu0 %569
  %573 = vset.pattern.permute.xlu0 0
  %574 = vperm.xlu0 %573, %v496
  %v575 = vpop.permute.xlu0 %574
  %578 = vset.pattern.permute.xlu0 0
  %579 = vperm.xlu0 %578, %v497
  %v580 = vpop.permute.xlu0 %579
  %583 = vset.pattern.permute.xlu0 0
  %584 = vperm.xlu0 %583, %v498
  %v585 = vpop.permute.xlu0 %584
  %588 = vset.pattern.permute.xlu0 0
  %589 = vperm.xlu0 %588, %v499
  %v590 = vpop.permute.xlu0 %589
  %593 = vset.pattern.permute.xlu0 0
  %594 = vperm.xlu0 %593, %v500
  %v595 = vpop.permute.xlu0 %594
  %598 = vset.pattern.permute.xlu0 0
  %599 = vperm.xlu0 %598, %v501
  %v600 = vpop.permute.xlu0 %599
  %603 = vset.pattern.permute.xlu0 0
  %604 = vperm.xlu0 %603, %v502
  %v605 = vpop.permute.xlu0 %604
  %608 = vset.pattern.permute.xlu0 0
  %609 = vperm.xlu0 %608, %v503
  %v610 = vpop.permute.xlu0 %609
  %613 = vset.pattern.permute.xlu0 0
  %614 = vperm.xlu0 %613, %v504
  %v615 = vpop.permute.xlu0 %614
  %618 = vset.pattern.permute.xlu0 0
  %619 = vperm.xlu0 %618, %v505
  %v620 = vpop.permute.xlu0 %619
  %623 = vset.pattern.permute.xlu0 0
  %624 = vperm.xlu0 %623, %v506
  %v625 = vpop.permute.xlu0 %624
  %628 = vset.pattern.permute.xlu0 0
  %629 = vperm.xlu0 %628, %v507
  %v630 = vpop.permute.xlu0 %629
  %633 = vset.pattern.permute.xlu0 0
  %634 = vperm.xlu0 %633, %v508
  %v635 = vpop.permute.xlu0 %634
  %v637 = vsub.f32 %v236, %v560
  %v638 = vsub.f32 %v237, %v565
  %v639 = vsub.f32 %v238, %v570
  %v640 = vsub.f32 %v239, %v575
  %v641 = vsub.f32 %v240, %v580
  %v642 = vsub.f32 %v241, %v585
  %v643 = vsub.f32 %v242, %v590
  %v644 = vsub.f32 %v243, %v595
  %v645 = vsub.f32 %v244, %v600
  %v646 = vsub.f32 %v245, %v605
  %v647 = vsub.f32 %v246, %v610
  %v648 = vsub.f32 %v247, %v615
  %v649 = vsub.f32 %v248, %v620
  %v650 = vsub.f32 %v249, %v625
  %v651 = vsub.f32 %v250, %v630
  %v652 = vsub.f32 %v251, %v635
  %v653 = vmul.f32 %v637, 1.442695
  %v654 = vpow.pop %v653
  %v655 = vmul.f32 %v638, 1.442695
  %v656 = vpow.pop %v655
  %v657 = vmul.f32 %v639, 1.442695
  %v658 = vpow.pop %v657
  %v659 = vmul.f32 %v640, 1.442695
  %v660 = vpow.pop %v659
  %v661 = vmul.f32 %v641, 1.442695
  %v662 = vpow.pop %v661
  %v663 = vmul.f32 %v642, 1.442695
  %v664 = vpow.pop %v663
  %v665 = vmul.f32 %v643, 1.442695
  %v666 = vpow.pop %v665
  %v667 = vmul.f32 %v644, 1.442695
  %v668 = vpow.pop %v667
  %v669 = vmul.f32 %v645, 1.442695
  %v670 = vpow.pop %v669
  %v671 = vmul.f32 %v646, 1.442695
  %v672 = vpow.pop %v671
  %v673 = vmul.f32 %v647, 1.442695
  %v674 = vpow.pop %v673
  %v675 = vmul.f32 %v648, 1.442695
  %v676 = vpow.pop %v675
  %v677 = vmul.f32 %v649, 1.442695
  %v678 = vpow.pop %v677
  %v679 = vmul.f32 %v650, 1.442695
  %v680 = vpow.pop %v679
  %v681 = vmul.f32 %v651, 1.442695
  %v682 = vpow.pop %v681
  %v683 = vmul.f32 %v652, 1.442695
  %v684 = vpow.pop %v683
  %v685 = vsel %vm381, %v654, 0.0
  %v686 = vsel %vm382, %v656, 0.0
  %v687 = vsel %vm383, %v658, 0.0
  %v688 = vsel %vm384, %v660, 0.0
  %v689 = vsel %vm385, %v662, 0.0
  %v690 = vsel %vm386, %v664, 0.0
  %v691 = vsel %vm387, %v666, 0.0
  %v692 = vsel %vm388, %v668, 0.0
  %v693 = vsel %vm389, %v670, 0.0
  %v694 = vsel %vm390, %v672, 0.0
  %v695 = vsel %vm391, %v674, 0.0
  %v696 = vsel %vm392, %v676, 0.0
  %v697 = vsel %vm393, %v678, 0.0
  %v698 = vsel %vm394, %v680, 0.0
  %v699 = vsel %vm395, %v682, 0.0
  %v700 = vsel %vm396, %v684, 0.0
  %v701 = vld [vmem:[#allocation3] sm:$0xff]
  %v702 = vld [vmem:[#allocation3 + $0x8] sm:$0xff]
  %v703 = vld [vmem:[#allocation3 + $0x10] sm:$0xff]
  %v704 = vld [vmem:[#allocation3 + $0x18] sm:$0xff]
  %v705 = vld [vmem:[#allocation3 + $0x20] sm:$0xff]
  %v706 = vld [vmem:[#allocation3 + $0x28] sm:$0xff]
  %v707 = vld [vmem:[#allocation3 + $0x30] sm:$0xff]
  %v708 = vld [vmem:[#allocation3 + $0x38] sm:$0xff]
  %v709 = vld [vmem:[#allocation3 + $0x40] sm:$0xff]
  %v710 = vld [vmem:[#allocation3 + $0x48] sm:$0xff]
  %v711 = vld [vmem:[#allocation3 + $0x50] sm:$0xff]
  %v712 = vld [vmem:[#allocation3 + $0x58] sm:$0xff]
  %v713 = vld [vmem:[#allocation3 + $0x60] sm:$0xff]
  %v714 = vld [vmem:[#allocation3 + $0x68] sm:$0xff]
  %v715 = vld [vmem:[#allocation3 + $0x70] sm:$0xff]
  %v716 = vld [vmem:[#allocation3 + $0x78] sm:$0xff]
  %v717 = vmul.f32 %v526, %v701
  %v718 = vmul.f32 %v528, %v702
  %v719 = vmul.f32 %v530, %v703
  %v720 = vmul.f32 %v532, %v704
  %v721 = vmul.f32 %v534, %v705
  %v722 = vmul.f32 %v536, %v706
  %v723 = vmul.f32 %v538, %v707
  %v724 = vmul.f32 %v540, %v708
  %v725 = vmul.f32 %v542, %v709
  %v726 = vmul.f32 %v544, %v710
  %v727 = vmul.f32 %v546, %v711
  %v728 = vmul.f32 %v548, %v712
  %v729 = vmul.f32 %v550, %v713
  %v730 = vmul.f32 %v552, %v714
  %v731 = vmul.f32 %v554, %v715
  %v732 = vmul.f32 %v556, %v716
  %733 = vadd.xlane.f32.xlu0 %v685
  %v734 = vpop.xlane.xlu0 %733
  %735 = vadd.xlane.f32.xlu0 %v686
  %v736 = vpop.xlane.xlu0 %735
  %737 = vadd.xlane.f32.xlu0 %v687
  %v738 = vpop.xlane.xlu0 %737
  %739 = vadd.xlane.f32.xlu0 %v688
  %v740 = vpop.xlane.xlu0 %739
  %741 = vadd.xlane.f32.xlu0 %v689
  %v742 = vpop.xlane.xlu0 %741
  %743 = vadd.xlane.f32.xlu0 %v690
  %v744 = vpop.xlane.xlu0 %743
  %745 = vadd.xlane.f32.xlu0 %v691
  %v746 = vpop.xlane.xlu0 %745
  %747 = vadd.xlane.f32.xlu0 %v692
  %v748 = vpop.xlane.xlu0 %747
  %749 = vadd.xlane.f32.xlu0 %v693
  %v750 = vpop.xlane.xlu0 %749
  %751 = vadd.xlane.f32.xlu0 %v694
  %v752 = vpop.xlane.xlu0 %751
  %753 = vadd.xlane.f32.xlu0 %v695
  %v754 = vpop.xlane.xlu0 %753
  %755 = vadd.xlane.f32.xlu0 %v696
  %v756 = vpop.xlane.xlu0 %755
  %757 = vadd.xlane.f32.xlu0 %v697
  %v758 = vpop.xlane.xlu0 %757
  %759 = vadd.xlane.f32.xlu0 %v698
  %v760 = vpop.xlane.xlu0 %759
  %761 = vadd.xlane.f32.xlu0 %v699
  %v762 = vpop.xlane.xlu0 %761
  %763 = vadd.xlane.f32.xlu0 %v700
  %v764 = vpop.xlane.xlu0 %763
  %v765 = vadd.f32 %v717, %v734
  %v766 = vadd.f32 %v718, %v736
  %v767 = vadd.f32 %v719, %v738
  %v768 = vadd.f32 %v720, %v740
  %v769 = vadd.f32 %v721, %v742
  %v770 = vadd.f32 %v722, %v744
  %v771 = vadd.f32 %v723, %v746
  %v772 = vadd.f32 %v724, %v748
  %v773 = vadd.f32 %v725, %v750
  %v774 = vadd.f32 %v726, %v752
  %v775 = vadd.f32 %v727, %v754
  %v776 = vadd.f32 %v728, %v756
  %v777 = vadd.f32 %v729, %v758
  %v778 = vadd.f32 %v730, %v760
  %v779 = vadd.f32 %v731, %v762
  %v780 = vadd.f32 %v732, %v764
  %vm781 = vcmask 7168
  %782 = vst.msk [vmem:[#allocation3] sm:$0xff] %vm781, %v765
  %783 = vst.msk [vmem:[#allocation3 + $0x8] sm:$0xff] %vm781, %v766
  %784 = vst.msk [vmem:[#allocation3 + $0x10] sm:$0xff] %vm781, %v767
  %785 = vst.msk [vmem:[#allocation3 + $0x18] sm:$0xff] %vm781, %v768
  %786 = vst.msk [vmem:[#allocation3 + $0x20] sm:$0xff] %vm781, %v769
  %787 = vst.msk [vmem:[#allocation3 + $0x28] sm:$0xff] %vm781, %v770
  %788 = vst.msk [vmem:[#allocation3 + $0x30] sm:$0xff] %vm781, %v771
  %789 = vst.msk [vmem:[#allocation3 + $0x38] sm:$0xff] %vm781, %v772
  %790 = vst.msk [vmem:[#allocation3 + $0x40] sm:$0xff] %vm781, %v773
  %791 = vst.msk [vmem:[#allocation3 + $0x48] sm:$0xff] %vm781, %v774
  %792 = vst.msk [vmem:[#allocation3 + $0x50] sm:$0xff] %vm781, %v775
  %793 = vst.msk [vmem:[#allocation3 + $0x58] sm:$0xff] %vm781, %v776
  %794 = vst.msk [vmem:[#allocation3 + $0x60] sm:$0xff] %vm781, %v777
  %795 = vst.msk [vmem:[#allocation3 + $0x68] sm:$0xff] %vm781, %v778
  %796 = vst.msk [vmem:[#allocation3 + $0x70] sm:$0xff] %vm781, %v779
  %797 = vst.msk [vmem:[#allocation3 + $0x78] sm:$0xff] %vm781, %v780
  %798 = vst.msk [vmem:[#allocation2] sm:$0xff] %vm781, %v461
  %799 = vst.msk [vmem:[#allocation2 + $0x8] sm:$0xff] %vm781, %v462
  %800 = vst.msk [vmem:[#allocation2 + $0x10] sm:$0xff] %vm781, %v463
  %801 = vst.msk [vmem:[#allocation2 + $0x18] sm:$0xff] %vm781, %v464
  %802 = vst.msk [vmem:[#allocation2 + $0x20] sm:$0xff] %vm781, %v465
  %803 = vst.msk [vmem:[#allocation2 + $0x28] sm:$0xff] %vm781, %v466
  %804 = vst.msk [vmem:[#allocation2 + $0x30] sm:$0xff] %vm781, %v467
  %805 = vst.msk [vmem:[#allocation2 + $0x38] sm:$0xff] %vm781, %v468
  %806 = vst.msk [vmem:[#allocation2 + $0x40] sm:$0xff] %vm781, %v469
  %807 = vst.msk [vmem:[#allocation2 + $0x48] sm:$0xff] %vm781, %v470
  %808 = vst.msk [vmem:[#allocation2 + $0x50] sm:$0xff] %vm781, %v471
  %809 = vst.msk [vmem:[#allocation2 + $0x58] sm:$0xff] %vm781, %v472
  %810 = vst.msk [vmem:[#allocation2 + $0x60] sm:$0xff] %vm781, %v473
  %811 = vst.msk [vmem:[#allocation2 + $0x68] sm:$0xff] %vm781, %v474
  %812 = vst.msk [vmem:[#allocation2 + $0x70] sm:$0xff] %vm781, %v475
  %813 = vst.msk [vmem:[#allocation2 + $0x78] sm:$0xff] %vm781, %v476
  // Predicated region
  $region26: #{tpu_custom_call.1} parent=0 // pred_check
    %p814 = pneg %p269
  $region27: #{tpu_custom_call.1} parent=0 // pred_check_branch
    %816 = sbr.rel (%p814) target = $region29
  $region28: #{tpu_custom_call.1} parent=0 // pred_region
    %v817 = vld [vmem:[#allocation2] sm:$0xff]
    %v818 = vld [vmem:[#allocation2 + $0x8] sm:$0xff]
    %v819 = vld [vmem:[#allocation2 + $0x10] sm:$0xff]
    %v820 = vld [vmem:[#allocation2 + $0x18] sm:$0xff]
    %v821 = vld [vmem:[#allocation2 + $0x20] sm:$0xff]
    %v822 = vld [vmem:[#allocation2 + $0x28] sm:$0xff]
    %v823 = vld [vmem:[#allocation2 + $0x30] sm:$0xff]
    %v824 = vld [vmem:[#allocation2 + $0x38] sm:$0xff]
    %v825 = vld [vmem:[#allocation2 + $0x40] sm:$0xff]
    %v826 = vld [vmem:[#allocation2 + $0x48] sm:$0xff]
    %v827 = vld [vmem:[#allocation2 + $0x50] sm:$0xff]
    %v828 = vld [vmem:[#allocation2 + $0x58] sm:$0xff]
    %v829 = vld [vmem:[#allocation2 + $0x60] sm:$0xff]
    %v830 = vld [vmem:[#allocation2 + $0x68] sm:$0xff]
    %v831 = vld [vmem:[#allocation2 + $0x70] sm:$0xff]
    %v832 = vld [vmem:[#allocation2 + $0x78] sm:$0xff]
    %v833 = vld [vmem:[#allocation3] sm:$0xff]
    %v834 = vld [vmem:[#allocation3 + $0x8] sm:$0xff]
    %v835 = vld [vmem:[#allocation3 + $0x10] sm:$0xff]
    %v836 = vld [vmem:[#allocation3 + $0x18] sm:$0xff]
    %v837 = vld [vmem:[#allocation3 + $0x20] sm:$0xff]
    %v838 = vld [vmem:[#allocation3 + $0x28] sm:$0xff]
    %v839 = vld [vmem:[#allocation3 + $0x30] sm:$0xff]
    %v840 = vld [vmem:[#allocation3 + $0x38] sm:$0xff]
    %v841 = vld [vmem:[#allocation3 + $0x40] sm:$0xff]
    %v842 = vld [vmem:[#allocation3 + $0x48] sm:$0xff]
    %v843 = vld [vmem:[#allocation3 + $0x50] sm:$0xff]
    %v844 = vld [vmem:[#allocation3 + $0x58] sm:$0xff]
    %v845 = vld [vmem:[#allocation3 + $0x60] sm:$0xff]
    %v846 = vld [vmem:[#allocation3 + $0x68] sm:$0xff]
    %v847 = vld [vmem:[#allocation3 + $0x70] sm:$0xff]
    %v848 = vld [vmem:[#allocation3 + $0x78] sm:$0xff]
    %v849 = vlog2.pop %v833
    %v850 = vmul.f32 %v849, 0.6931472
    %v851 = vlog2.pop %v834
    %v852 = vmul.f32 %v851, 0.6931472
    %v853 = vlog2.pop %v835
    %v854 = vmul.f32 %v853, 0.6931472
    %v855 = vlog2.pop %v836
    %v856 = vmul.f32 %v855, 0.6931472
    %v857 = vlog2.pop %v837
    %v858 = vmul.f32 %v857, 0.6931472
    %v859 = vlog2.pop %v838
    %v860 = vmul.f32 %v859, 0.6931472
    %v861 = vlog2.pop %v839
    %v862 = vmul.f32 %v861, 0.6931472
    %v863 = vlog2.pop %v840
    %v864 = vmul.f32 %v863, 0.6931472
    %v865 = vlog2.pop %v841
    %v866 = vmul.f32 %v865, 0.6931472
    %v867 = vlog2.pop %v842
    %v868 = vmul.f32 %v867, 0.6931472
    %v869 = vlog2.pop %v843
    %v870 = vmul.f32 %v869, 0.6931472
    %v871 = vlog2.pop %v844
    %v872 = vmul.f32 %v871, 0.6931472
    %v873 = vlog2.pop %v845
    %v874 = vmul.f32 %v873, 0.6931472
    %v875 = vlog2.pop %v846
    %v876 = vmul.f32 %v875, 0.6931472
    %v877 = vlog2.pop %v847
    %v878 = vmul.f32 %v877, 0.6931472
    %v879 = vlog2.pop %v848
    %v880 = vmul.f32 %v879, 0.6931472
    %v881 = vadd.f32 %v817, %v850
    %v882 = vadd.f32 %v818, %v852
    %v883 = vadd.f32 %v819, %v854
    %v884 = vadd.f32 %v820, %v856
    %v885 = vadd.f32 %v821, %v858
    %v886 = vadd.f32 %v822, %v860
    %v887 = vadd.f32 %v823, %v862
    %v888 = vadd.f32 %v824, %v864
    %v889 = vadd.f32 %v825, %v866
    %v890 = vadd.f32 %v826, %v868
    %v891 = vadd.f32 %v827, %v870
    %v892 = vadd.f32 %v828, %v872
    %v893 = vadd.f32 %v829, %v874
    %v894 = vadd.f32 %v830, %v876
    %v895 = vadd.f32 %v831, %v878
    %v896 = vadd.f32 %v832, %v880
    %vm897 = vcmp.ge.s32.totalorder %v21, 0
    %vm898 = vcmp.ge.s32.totalorder %v22, 0
    %vm899 = vcmp.ge.s32.totalorder %v23, 0
    %vm900 = vcmp.ge.s32.totalorder %v24, 0
    %vm901 = vcmp.ge.s32.totalorder %v25, 0
    %vm902 = vcmp.ge.s32.totalorder %v26, 0
    %vm903 = vcmp.ge.s32.totalorder %v27, 0
    %vm904 = vcmp.ge.s32.totalorder %v28, 0
    %vm905 = vcmp.ge.s32.totalorder %v29, 0
    %vm906 = vcmp.ge.s32.totalorder %v30, 0
    %vm907 = vcmp.ge.s32.totalorder %v31, 0
    %vm908 = vcmp.ge.s32.totalorder %v32, 0
    %vm909 = vcmp.ge.s32.totalorder %v33, 0
    %vm910 = vcmp.ge.s32.totalorder %v34, 0
    %vm911 = vcmp.ge.s32.totalorder %v35, 0
    %vm912 = vcmp.ge.s32.totalorder %v36, 0
    %v913 = vlaneseq
    %v914 = vshrl.u32 %v913, 7
    %v915 = vadd.s32 %v914, 8
    %v916 = vadd.s32 %v914, 16
    %v917 = vadd.s32 %v914, 24
    %v918 = vadd.s32 %v914, 32
    %v919 = vadd.s32 %v914, 40
    %v920 = vadd.s32 %v914, 48
    %v921 = vadd.s32 %v914, 56
    %v922 = vadd.s32 %v914, 64
    %v923 = vadd.s32 %v914, 72
    %v924 = vadd.s32 %v914, 80
    %v925 = vadd.s32 %v914, 88
    %v926 = vadd.s32 %v914, 96
    %v927 = vadd.s32 %v914, 104
    %v928 = vadd.s32 %v914, 112
    %v929 = vadd.s32 %v914, 120
    %v930 = vlaneseq
    %v931 = vand.u32 %v930, 127
    %vm932 = vcmp.eq.s32.totalorder %v914, %v931
    %vm933 = vcmp.eq.s32.totalorder %v915, %v931
    %vm934 = vcmp.eq.s32.totalorder %v916, %v931
    %vm935 = vcmp.eq.s32.totalorder %v917, %v931
    %vm936 = vcmp.eq.s32.totalorder %v918, %v931
    %vm937 = vcmp.eq.s32.totalorder %v919, %v931
    %vm938 = vcmp.eq.s32.totalorder %v920, %v931
    %vm939 = vcmp.eq.s32.totalorder %v921, %v931
    %vm940 = vcmp.eq.s32.totalorder %v922, %v931
    %vm941 = vcmp.eq.s32.totalorder %v923, %v931
    %vm942 = vcmp.eq.s32.totalorder %v924, %v931
    %vm943 = vcmp.eq.s32.totalorder %v925, %v931
    %vm944 = vcmp.eq.s32.totalorder %v926, %v931
    %vm945 = vcmp.eq.s32.totalorder %v927, %v931
    %vm946 = vcmp.eq.s32.totalorder %v928, %v931
    %vm947 = vcmp.eq.s32.totalorder %v929, %v931
    %v948 = vld [vmem:[#allocation4] sm:$0xff]
    %v949 = vld [vmem:[#allocation4 + $0x8] sm:$0xff]
    %v950 = vld [vmem:[#allocation4 + $0x10] sm:$0xff]
    %v951 = vld [vmem:[#allocation4 + $0x18] sm:$0xff]
    %v952 = vld [vmem:[#allocation4 + $0x20] sm:$0xff]
    %v953 = vld [vmem:[#allocation4 + $0x28] sm:$0xff]
    %v954 = vld [vmem:[#allocation4 + $0x30] sm:$0xff]
    %v955 = vld [vmem:[#allocation4 + $0x38] sm:$0xff]
    %v956 = vld [vmem:[#allocation4 + $0x40] sm:$0xff]
    %v957 = vld [vmem:[#allocation4 + $0x48] sm:$0xff]
    %v958 = vld [vmem:[#allocation4 + $0x50] sm:$0xff]
    %v959 = vld [vmem:[#allocation4 + $0x58] sm:$0xff]
    %v960 = vld [vmem:[#allocation4 + $0x60] sm:$0xff]
    %v961 = vld [vmem:[#allocation4 + $0x68] sm:$0xff]
    %v962 = vld [vmem:[#allocation4 + $0x70] sm:$0xff]
    %v963 = vld [vmem:[#allocation4 + $0x78] sm:$0xff]
    %v964 = vld [vmem:[%s3] sm:$0x1]
    %v965 = vld [vmem:[%s4] sm:$0x1]
    %p966 = scmp.eq.s32.totalorder 0, 0
    %s967 = scalar_select %p966, 1, 0
    %v968 = vstv %s967
    %vm969 = vcmp.eq.s32.totalorder %v968, 1
    %vm970 = vmand %vm932, %vm969
    %vm971 = vmand %vm933, %vm969
    %vm972 = vmand %vm934, %vm969
    %vm973 = vmand %vm935, %vm969
    %vm974 = vmand %vm936, %vm969
    %vm975 = vmand %vm937, %vm969
    %vm976 = vmand %vm938, %vm969
    %vm977 = vmand %vm939, %vm969
    %vm978 = vmand %vm940, %vm969
    %vm979 = vmand %vm941, %vm969
    %vm980 = vmand %vm942, %vm969
    %vm981 = vmand %vm943, %vm969
    %vm982 = vmand %vm944, %vm969
    %vm983 = vmand %vm945, %vm969
    %vm984 = vmand %vm946, %vm969
    %vm985 = vmand %vm947, %vm969
    %v986 = vlaneseq
    %v987 = vshrl.u32 %v986, 7
    %v988 = vsub.s32 0, %v987
    %v989 = vrot.slane %v964, %v988
    %vm990 = vcmp.eq.s32.totalorder %v989, %v312
    %vm991 = vcmp.eq.s32.totalorder %v989, %v315
    %vm992 = vcmp.eq.s32.totalorder %v989, %v318
    %vm993 = vcmp.eq.s32.totalorder %v989, %v321
    %vm994 = vcmp.eq.s32.totalorder %v989, %v324
    %vm995 = vcmp.eq.s32.totalorder %v989, %v327
    %vm996 = vcmp.eq.s32.totalorder %v989, %v330
    %vm997 = vcmp.eq.s32.totalorder %v989, %v333
    %vm998 = vcmp.eq.s32.totalorder %v989, %v336
    %vm999 = vcmp.eq.s32.totalorder %v989, %v339
    %vm1000 = vcmp.eq.s32.totalorder %v989, %v342
    %vm1001 = vcmp.eq.s32.totalorder %v989, %v345
    %vm1002 = vcmp.eq.s32.totalorder %v989, %v348
    %vm1003 = vcmp.eq.s32.totalorder %v989, %v351
    %vm1004 = vcmp.eq.s32.totalorder %v989, %v354
    %vm1005 = vcmp.eq.s32.totalorder %v989, %v357
    %v1006 = vsel %vm897, 1, 0
    %v1007 = vsel %vm898, 1, 0
    %v1008 = vsel %vm899, 1, 0
    %v1009 = vsel %vm900, 1, 0
    %v1010 = vsel %vm901, 1, 0
    %v1011 = vsel %vm902, 1, 0
    %v1012 = vsel %vm903, 1, 0
    %v1013 = vsel %vm904, 1, 0
    %v1014 = vsel %vm905, 1, 0
    %v1015 = vsel %vm906, 1, 0
    %v1016 = vsel %vm907, 1, 0
    %v1017 = vsel %vm908, 1, 0
    %v1018 = vsel %vm909, 1, 0
    %v1019 = vsel %vm910, 1, 0
    %v1020 = vsel %vm911, 1, 0
    %v1021 = vsel %vm912, 1, 0
    %1022 = vset.pattern.permute.xlu0 0
    %1023 = vperm.xlu0 %1022, %v1006
    %v1024 = vpop.permute.xlu0 %1023
    %1025 = vset.pattern.permute.xlu0 0
    %1026 = vperm.xlu0 %1025, %v1007
    %v1027 = vpop.permute.xlu0 %1026
    %1028 = vset.pattern.permute.xlu0 0
    %1029 = vperm.xlu0 %1028, %v1008
    %v1030 = vpop.permute.xlu0 %1029
    %1031 = vset.pattern.permute.xlu0 0
    %1032 = vperm.xlu0 %1031, %v1009
    %v1033 = vpop.permute.xlu0 %1032
    %1034 = vset.pattern.permute.xlu0 0
    %1035 = vperm.xlu0 %1034, %v1010
    %v1036 = vpop.permute.xlu0 %1035
    %1037 = vset.pattern.permute.xlu0 0
    %1038 = vperm.xlu0 %1037, %v1011
    %v1039 = vpop.permute.xlu0 %1038
    %1040 = vset.pattern.permute.xlu0 0
    %1041 = vperm.xlu0 %1040, %v1012
    %v1042 = vpop.permute.xlu0 %1041
    %1043 = vset.pattern.permute.xlu0 0
    %1044 = vperm.xlu0 %1043, %v1013
    %v1045 = vpop.permute.xlu0 %1044
    %1046 = vset.pattern.permute.xlu0 0
    %1047 = vperm.xlu0 %1046, %v1014
    %v1048 = vpop.permute.xlu0 %1047
    %1049 = vset.pattern.permute.xlu0 0
    %1050 = vperm.xlu0 %1049, %v1015
    %v1051 = vpop.permute.xlu0 %1050
    %1052 = vset.pattern.permute.xlu0 0
    %1053 = vperm.xlu0 %1052, %v1016
    %v1054 = vpop.permute.xlu0 %1053
    %1055 = vset.pattern.permute.xlu0 0
    %1056 = vperm.xlu0 %1055, %v1017
    %v1057 = vpop.permute.xlu0 %1056
    %1058 = vset.pattern.permute.xlu0 0
    %1059 = vperm.xlu0 %1058, %v1018
    %v1060 = vpop.permute.xlu0 %1059
    %1061 = vset.pattern.permute.xlu0 0
    %1062 = vperm.xlu0 %1061, %v1019
    %v1063 = vpop.permute.xlu0 %1062
    %1064 = vset.pattern.permute.xlu0 0
    %1065 = vperm.xlu0 %1064, %v1020
    %v1066 = vpop.permute.xlu0 %1065
    %1067 = vset.pattern.permute.xlu0 0
    %1068 = vperm.xlu0 %1067, %v1021
    %v1069 = vpop.permute.xlu0 %1068
    %vm1070 = vcmp.eq.s32.totalorder %v1024, 1
    %vm1071 = vcmp.eq.s32.totalorder %v1027, 1
    %vm1072 = vcmp.eq.s32.totalorder %v1030, 1
    %vm1073 = vcmp.eq.s32.totalorder %v1033, 1
    %vm1074 = vcmp.eq.s32.totalorder %v1036, 1
    %vm1075 = vcmp.eq.s32.totalorder %v1039, 1
    %vm1076 = vcmp.eq.s32.totalorder %v1042, 1
    %vm1077 = vcmp.eq.s32.totalorder %v1045, 1
    %vm1078 = vcmp.eq.s32.totalorder %v1048, 1
    %vm1079 = vcmp.eq.s32.totalorder %v1051, 1
    %vm1080 = vcmp.eq.s32.totalorder %v1054, 1
    %vm1081 = vcmp.eq.s32.totalorder %v1057, 1
    %vm1082 = vcmp.eq.s32.totalorder %v1060, 1
    %vm1083 = vcmp.eq.s32.totalorder %v1063, 1
    %vm1084 = vcmp.eq.s32.totalorder %v1066, 1
    %vm1085 = vcmp.eq.s32.totalorder %v1069, 1
    %vm1086 = vmand %vm990, %vm1070
    %vm1087 = vmand %vm991, %vm1071
    %vm1088 = vmand %vm992, %vm1072
    %vm1089 = vmand %vm993, %vm1073
    %vm1090 = vmand %vm994, %vm1074
    %vm1091 = vmand %vm995, %vm1075
    %vm1092 = vmand %vm996, %vm1076
    %vm1093 = vmand %vm997, %vm1077
    %vm1094 = vmand %vm998, %vm1078
    %vm1095 = vmand %vm999, %vm1079
    %vm1096 = vmand %vm1000, %vm1080
    %vm1097 = vmand %vm1001, %vm1081
    %vm1098 = vmand %vm1002, %vm1082
    %vm1099 = vmand %vm1003, %vm1083
    %vm1100 = vmand %vm1004, %vm1084
    %vm1101 = vmand %vm1005, %vm1085
    %vm1102 = vmxor %vm970, 1
    %vm1103 = vmxor %vm971, 1
    %vm1104 = vmxor %vm972, 1
    %vm1105 = vmxor %vm973, 1
    %vm1106 = vmxor %vm974, 1
    %vm1107 = vmxor %vm975, 1
    %vm1108 = vmxor %vm976, 1
    %vm1109 = vmxor %vm977, 1
    %vm1110 = vmxor %vm978, 1
    %vm1111 = vmxor %vm979, 1
    %vm1112 = vmxor %vm980, 1
    %vm1113 = vmxor %vm981, 1
    %vm1114 = vmxor %vm982, 1
    %vm1115 = vmxor %vm983, 1
    %vm1116 = vmxor %vm984, 1
    %vm1117 = vmxor %vm985, 1
    %vm1118 = vmand %vm1086, %vm1102
    %vm1119 = vmand %vm1087, %vm1103
    %vm1120 = vmand %vm1088, %vm1104
    %vm1121 = vmand %vm1089, %vm1105
    %vm1122 = vmand %vm1090, %vm1106
    %vm1123 = vmand %vm1091, %vm1107
    %vm1124 = vmand %vm1092, %vm1108
    %vm1125 = vmand %vm1093, %vm1109
    %vm1126 = vmand %vm1094, %vm1110
    %vm1127 = vmand %vm1095, %vm1111
    %vm1128 = vmand %vm1096, %vm1112
    %vm1129 = vmand %vm1097, %vm1113
    %vm1130 = vmand %vm1098, %vm1114
    %vm1131 = vmand %vm1099, %vm1115
    %vm1132 = vmand %vm1100, %vm1116
    %vm1133 = vmand %vm1101, %vm1117
    %1135 = vset.pattern.permute.xlu0 0
    %1136 = vperm.xlu0 %1135, %v881
    %v1137 = vpop.permute.xlu0 %1136
    %1140 = vset.pattern.permute.xlu0 0
    %1141 = vperm.xlu0 %1140, %v882
    %v1142 = vpop.permute.xlu0 %1141
    %1145 = vset.pattern.permute.xlu0 0
    %1146 = vperm.xlu0 %1145, %v883
    %v1147 = vpop.permute.xlu0 %1146
    %1150 = vset.pattern.permute.xlu0 0
    %1151 = vperm.xlu0 %1150, %v884
    %v1152 = vpop.permute.xlu0 %1151
    %1155 = vset.pattern.permute.xlu0 0
    %1156 = vperm.xlu0 %1155, %v885
    %v1157 = vpop.permute.xlu0 %1156
    %1160 = vset.pattern.permute.xlu0 0
    %1161 = vperm.xlu0 %1160, %v886
    %v1162 = vpop.permute.xlu0 %1161
    %1165 = vset.pattern.permute.xlu0 0
    %1166 = vperm.xlu0 %1165, %v887
    %v1167 = vpop.permute.xlu0 %1166
    %1170 = vset.pattern.permute.xlu0 0
    %1171 = vperm.xlu0 %1170, %v888
    %v1172 = vpop.permute.xlu0 %1171
    %1175 = vset.pattern.permute.xlu0 0
    %1176 = vperm.xlu0 %1175, %v889
    %v1177 = vpop.permute.xlu0 %1176
    %1180 = vset.pattern.permute.xlu0 0
    %1181 = vperm.xlu0 %1180, %v890
    %v1182 = vpop.permute.xlu0 %1181
    %1185 = vset.pattern.permute.xlu0 0
    %1186 = vperm.xlu0 %1185, %v891
    %v1187 = vpop.permute.xlu0 %1186
    %1190 = vset.pattern.permute.xlu0 0
    %1191 = vperm.xlu0 %1190, %v892
    %v1192 = vpop.permute.xlu0 %1191
    %1195 = vset.pattern.permute.xlu0 0
    %1196 = vperm.xlu0 %1195, %v893
    %v1197 = vpop.permute.xlu0 %1196
    %1200 = vset.pattern.permute.xlu0 0
    %1201 = vperm.xlu0 %1200, %v894
    %v1202 = vpop.permute.xlu0 %1201
    %1205 = vset.pattern.permute.xlu0 0
    %1206 = vperm.xlu0 %1205, %v895
    %v1207 = vpop.permute.xlu0 %1206
    %1210 = vset.pattern.permute.xlu0 0
    %1211 = vperm.xlu0 %1210, %v896
    %v1212 = vpop.permute.xlu0 %1211
    %v1214 = vsub.f32 %v1137, %v948
    %v1215 = vsub.f32 %v1142, %v949
    %v1216 = vsub.f32 %v1147, %v950
    %v1217 = vsub.f32 %v1152, %v951
    %v1218 = vsub.f32 %v1157, %v952
    %v1219 = vsub.f32 %v1162, %v953
    %v1220 = vsub.f32 %v1167, %v954
    %v1221 = vsub.f32 %v1172, %v955
    %v1222 = vsub.f32 %v1177, %v956
    %v1223 = vsub.f32 %v1182, %v957
    %v1224 = vsub.f32 %v1187, %v958
    %v1225 = vsub.f32 %v1192, %v959
    %v1226 = vsub.f32 %v1197, %v960
    %v1227 = vsub.f32 %v1202, %v961
    %v1228 = vsub.f32 %v1207, %v962
    %v1229 = vsub.f32 %v1212, %v963
    %v1230 = vmul.f32 %v1214, 1.442695
    %v1231 = vpow.pop %v1230
    %v1232 = vmul.f32 %v1215, 1.442695
    %v1233 = vpow.pop %v1232
    %v1234 = vmul.f32 %v1216, 1.442695
    %v1235 = vpow.pop %v1234
    %v1236 = vmul.f32 %v1217, 1.442695
    %v1237 = vpow.pop %v1236
    %v1238 = vmul.f32 %v1218, 1.442695
    %v1239 = vpow.pop %v1238
    %v1240 = vmul.f32 %v1219, 1.442695
    %v1241 = vpow.pop %v1240
    %v1242 = vmul.f32 %v1220, 1.442695
    %v1243 = vpow.pop %v1242
    %v1244 = vmul.f32 %v1221, 1.442695
    %v1245 = vpow.pop %v1244
    %v1246 = vmul.f32 %v1222, 1.442695
    %v1247 = vpow.pop %v1246
    %v1248 = vmul.f32 %v1223, 1.442695
    %v1249 = vpow.pop %v1248
    %v1250 = vmul.f32 %v1224, 1.442695
    %v1251 = vpow.pop %v1250
    %v1252 = vmul.f32 %v1225, 1.442695
    %v1253 = vpow.pop %v1252
    %v1254 = vmul.f32 %v1226, 1.442695
    %v1255 = vpow.pop %v1254
    %v1256 = vmul.f32 %v1227, 1.442695
    %v1257 = vpow.pop %v1256
    %v1258 = vmul.f32 %v1228, 1.442695
    %v1259 = vpow.pop %v1258
    %v1260 = vmul.f32 %v1229, 1.442695
    %v1261 = vpow.pop %v1260
    %v1262 = vadd.f32 %v1231, 0.7788008
    %v1263 = vadd.f32 %v1233, 0.7788008
    %v1264 = vadd.f32 %v1235, 0.7788008
    %v1265 = vadd.f32 %v1237, 0.7788008
    %v1266 = vadd.f32 %v1239, 0.7788008
    %v1267 = vadd.f32 %v1241, 0.7788008
    %v1268 = vadd.f32 %v1243, 0.7788008
    %v1269 = vadd.f32 %v1245, 0.7788008
    %v1270 = vadd.f32 %v1247, 0.7788008
    %v1271 = vadd.f32 %v1249, 0.7788008
    %v1272 = vadd.f32 %v1251, 0.7788008
    %v1273 = vadd.f32 %v1253, 0.7788008
    %v1274 = vadd.f32 %v1255, 0.7788008
    %v1275 = vadd.f32 %v1257, 0.7788008
    %v1276 = vadd.f32 %v1259, 0.7788008
    %v1277 = vadd.f32 %v1261, 0.7788008
    %v1278 = vlog2.pop %v1262
    %v1279 = vmul.f32 %v1278, 0.6931472
    %v1280 = vlog2.pop %v1263
    %v1281 = vmul.f32 %v1280, 0.6931472
    %v1282 = vlog2.pop %v1264
    %v1283 = vmul.f32 %v1282, 0.6931472
    %v1284 = vlog2.pop %v1265
    %v1285 = vmul.f32 %v1284, 0.6931472
    %v1286 = vlog2.pop %v1266
    %v1287 = vmul.f32 %v1286, 0.6931472
    %v1288 = vlog2.pop %v1267
    %v1289 = vmul.f32 %v1288, 0.6931472
    %v1290 = vlog2.pop %v1268
    %v1291 = vmul.f32 %v1290, 0.6931472
    %v1292 = vlog2.pop %v1269
    %v1293 = vmul.f32 %v1292, 0.6931472
    %v1294 = vlog2.pop %v1270
    %v1295 = vmul.f32 %v1294, 0.6931472
    %v1296 = vlog2.pop %v1271
    %v1297 = vmul.f32 %v1296, 0.6931472
    %v1298 = vlog2.pop %v1272
    %v1299 = vmul.f32 %v1298, 0.6931472
    %v1300 = vlog2.pop %v1273
    %v1301 = vmul.f32 %v1300, 0.6931472
    %v1302 = vlog2.pop %v1274
    %v1303 = vmul.f32 %v1302, 0.6931472
    %v1304 = vlog2.pop %v1275
    %v1305 = vmul.f32 %v1304, 0.6931472
    %v1306 = vlog2.pop %v1276
    %v1307 = vmul.f32 %v1306, 0.6931472
    %v1308 = vlog2.pop %v1277
    %v1309 = vmul.f32 %v1308, 0.6931472
    %v1310 = vsel %vm1118, %v1279, 0.0
    %v1311 = vsel %vm1119, %v1281, 0.0
    %v1312 = vsel %vm1120, %v1283, 0.0
    %v1313 = vsel %vm1121, %v1285, 0.0
    %v1314 = vsel %vm1122, %v1287, 0.0
    %v1315 = vsel %vm1123, %v1289, 0.0
    %v1316 = vsel %vm1124, %v1291, 0.0
    %v1317 = vsel %vm1125, %v1293, 0.0
    %v1318 = vsel %vm1126, %v1295, 0.0
    %v1319 = vsel %vm1127, %v1297, 0.0
    %v1320 = vsel %vm1128, %v1299, 0.0
    %v1321 = vsel %vm1129, %v1301, 0.0
    %v1322 = vsel %vm1130, %v1303, 0.0
    %v1323 = vsel %vm1131, %v1305, 0.0
    %v1324 = vsel %vm1132, %v1307, 0.0
    %v1325 = vsel %vm1133, %v1309, 0.0
    %v1327 = vlaneseq
    %v1328 = vshrl.u32 %v1327, 7
    %v1329 = vsub.s32 0, %v1328
    %v1330 = vrot.slane %v965, %v1329
    %v1332 = vmul.f32 %v1310, %v1330
    %v1333 = vmul.f32 %v1311, %v1330
    %v1334 = vmul.f32 %v1312, %v1330
    %v1335 = vmul.f32 %v1313, %v1330
    %v1336 = vmul.f32 %v1314, %v1330
    %v1337 = vmul.f32 %v1315, %v1330
    %v1338 = vmul.f32 %v1316, %v1330
    %v1339 = vmul.f32 %v1317, %v1330
    %v1340 = vmul.f32 %v1318, %v1330
    %v1341 = vmul.f32 %v1319, %v1330
    %v1342 = vmul.f32 %v1320, %v1330
    %v1343 = vmul.f32 %v1321, %v1330
    %v1344 = vmul.f32 %v1322, %v1330
    %v1345 = vmul.f32 %v1323, %v1330
    %v1346 = vmul.f32 %v1324, %v1330
    %v1347 = vmul.f32 %v1325, %v1330
    %1348 = vadd.xlane.f32.xlu0 %v1332
    %v1349 = vpop.xlane.xlu0 %1348
    %1350 = vadd.xlane.f32.xlu0 %v1333
    %v1351 = vpop.xlane.xlu0 %1350
    %1352 = vadd.xlane.f32.xlu0 %v1334
    %v1353 = vpop.xlane.xlu0 %1352
    %1354 = vadd.xlane.f32.xlu0 %v1335
    %v1355 = vpop.xlane.xlu0 %1354
    %1356 = vadd.xlane.f32.xlu0 %v1336
    %v1357 = vpop.xlane.xlu0 %1356
    %1358 = vadd.xlane.f32.xlu0 %v1337
    %v1359 = vpop.xlane.xlu0 %1358
    %1360 = vadd.xlane.f32.xlu0 %v1338
    %v1361 = vpop.xlane.xlu0 %1360
    %1362 = vadd.xlane.f32.xlu0 %v1339
    %v1363 = vpop.xlane.xlu0 %1362
    %1364 = vadd.xlane.f32.xlu0 %v1340
    %v1365 = vpop.xlane.xlu0 %1364
    %1366 = vadd.xlane.f32.xlu0 %v1341
    %v1367 = vpop.xlane.xlu0 %1366
    %1368 = vadd.xlane.f32.xlu0 %v1342
    %v1369 = vpop.xlane.xlu0 %1368
    %1370 = vadd.xlane.f32.xlu0 %v1343
    %v1371 = vpop.xlane.xlu0 %1370
    %1372 = vadd.xlane.f32.xlu0 %v1344
    %v1373 = vpop.xlane.xlu0 %1372
    %1374 = vadd.xlane.f32.xlu0 %v1345
    %v1375 = vpop.xlane.xlu0 %1374
    %1376 = vadd.xlane.f32.xlu0 %v1346
    %v1377 = vpop.xlane.xlu0 %1376
    %1378 = vadd.xlane.f32.xlu0 %v1347
    %v1379 = vpop.xlane.xlu0 %1378
    %v1380 = vadd.f32 %v1349, 0.0
    %v1381 = vadd.f32 %v1351, 0.0
    %v1382 = vadd.f32 %v1353, 0.0
    %v1383 = vadd.f32 %v1355, 0.0
    %v1384 = vadd.f32 %v1357, 0.0
    %v1385 = vadd.f32 %v1359, 0.0
    %v1386 = vadd.f32 %v1361, 0.0
    %v1387 = vadd.f32 %v1363, 0.0
    %v1388 = vadd.f32 %v1365, 0.0
    %v1389 = vadd.f32 %v1367, 0.0
    %v1390 = vadd.f32 %v1369, 0.0
    %v1391 = vadd.f32 %v1371, 0.0
    %v1392 = vadd.f32 %v1373, 0.0
    %v1393 = vadd.f32 %v1375, 0.0
    %v1394 = vadd.f32 %v1377, 0.0
    %v1395 = vadd.f32 %v1379, 0.0
    %1396 = vst.msk [vmem:[%s5] sm:$0xff] %vm781, %v1380
    %1397 = vst.msk [vmem:[%s5 + $0x8] sm:$0xff] %vm781, %v1381
    %1398 = vst.msk [vmem:[%s5 + $0x10] sm:$0xff] %vm781, %v1382
    %1399 = vst.msk [vmem:[%s5 + $0x18] sm:$0xff] %vm781, %v1383
    %1400 = vst.msk [vmem:[%s5 + $0x20] sm:$0xff] %vm781, %v1384
    %1401 = vst.msk [vmem:[%s5 + $0x28] sm:$0xff] %vm781, %v1385
    %1402 = vst.msk [vmem:[%s5 + $0x30] sm:$0xff] %vm781, %v1386
    %1403 = vst.msk [vmem:[%s5 + $0x38] sm:$0xff] %vm781, %v1387
    %1404 = vst.msk [vmem:[%s5 + $0x40] sm:$0xff] %vm781, %v1388
    %1405 = vst.msk [vmem:[%s5 + $0x48] sm:$0xff] %vm781, %v1389
    %1406 = vst.msk [vmem:[%s5 + $0x50] sm:$0xff] %vm781, %v1390
    %1407 = vst.msk [vmem:[%s5 + $0x58] sm:$0xff] %vm781, %v1391
    %1408 = vst.msk [vmem:[%s5 + $0x60] sm:$0xff] %vm781, %v1392
    %1409 = vst.msk [vmem:[%s5 + $0x68] sm:$0xff] %vm781, %v1393
    %1410 = vst.msk [vmem:[%s5 + $0x70] sm:$0xff] %vm781, %v1394
    %1411 = vst.msk [vmem:[%s5 + $0x78] sm:$0xff] %vm781, %v1395
  $region29: #{tpu_custom_call.1} parent=0 // pred_fallthru
    _
  // Predicated region
  $region30: #{tpu_custom_call.1} parent=0 // pred_check
    _
  $region31: #{tpu_custom_call.1} parent=0 // pred_check_branch
    %1413 = sbr.rel (0) target = $region33
  $region32: #{tpu_custom_call.1} parent=0 // pred_region
    _
  $region33: #{tpu_custom_call.1} parent=0 // pred_fallthru
    _
  // Predicated region
  $region34: #{tpu_custom_call.1} parent=0 // pred_check
    _
  $region35: #{tpu_custom_call.1} parent=0 // pred_check_branch
    %1415 = sbr.rel (0) target = $region37
  $region36: #{tpu_custom_call.1} parent=0 // pred_region
    _
  $region37: #{tpu_custom_call.1} parent=0 // pred_fallthru
    _

</llo_original>
